<compile_context>
chip_gen: v7x
topology: tpu7x:2x2x1
jax: 0.10.0
libtpu: 0.0.40
codegen_flags: <defaults>
</compile_context>

<pallas_src>
import functools

import jax
import jax.numpy as jnp
from jax import lax
from jax.experimental import pallas as pl
from jax.experimental.pallas import tpu as pltpu


# ---------------------------------------------------------------------------
# Fused kernel (single grid step):
#   qkv = x_flat @ W_qkv                       (one wide matmul, all batches/heads)
#   per (head h, batch b):
#       s = (q_h,b @ k_h,b^T) * C^{-0.5};  p = softmax(s);  out_h,b = p @ v_h,b
#   y = concat_h(out_h) @ W_proj + b           (one projection matmul)
# ---------------------------------------------------------------------------
def _mha_fused_kernel(x_ref, wqkv_ref, wproj_ref, b_ref, o_ref, *,
                      batch, seq_len, num_heads, head_size, n_embd):
    B, T, C = batch, seq_len, n_embd
    H, hs = num_heads, head_size
    HH = H * hs

    xf = x_ref[...]            # (B*T, C)
    w_qkv = wqkv_ref[...]      # (C, 3*HH)  = [Q-heads | K-heads | V-heads]
    w_proj = wproj_ref[...]    # (HH, C)

    # Single wide QKV projection for all batches & heads (packs the MXU lane dim).
    qkv = jnp.dot(xf, w_qkv, preferred_element_type=jnp.float32)   # (B*T, 3*HH)

    scale = jnp.float32(C) ** jnp.float32(-0.5)   # karpathy-style: scale by n_embd

    # Per-(head, batch) attention; H*B = 8 tiny static steps at these shapes.
    # TODO(synk): at real H/T use lax.fori_loop + flash tiling (bounded live ranges).
    head_outs = []
    for h in range(H):
        q_h = qkv[:, h * hs:(h + 1) * hs]                       # (B*T, hs)
        k_h = qkv[:, HH + h * hs: HH + (h + 1) * hs]            # (B*T, hs)
        v_h = qkv[:, 2 * HH + h * hs: 2 * HH + (h + 1) * hs]    # (B*T, hs)
        per_batch = []
        for b in range(B):                                      # static slices
            q = q_h[b * T:(b + 1) * T]                          # (T, hs)
            k = k_h[b * T:(b + 1) * T]
            v = v_h[b * T:(b + 1) * T]

            # q @ k^T without an explicit transpose (contract dim 1 with dim 1).
            s = lax.dot_general(q, k, (((1,), (1,)), ((), ())),
                                preferred_element_type=jnp.float32) * scale  # (T, T)
            s = s - jnp.max(s, axis=-1, keepdims=True)          # stable softmax
            p = jnp.exp(s)
            p = p * pl.reciprocal(jnp.sum(p, axis=-1, keepdims=True), approx=True)

            per_batch.append(jnp.dot(p, v, preferred_element_type=jnp.float32))
        head_outs.append(jnp.concatenate(per_batch, axis=0))    # (B*T, hs)

    cat = jnp.concatenate(head_outs, axis=1)                    # (B*T, HH)

    # Single fused output projection + bias (b_ref is (1, C), broadcasts over rows).
    y = jnp.dot(cat, w_proj, preferred_element_type=jnp.float32) + b_ref[...]
    o_ref[...] = y.astype(o_ref.dtype)


def pack_mha_params(wq, wk, wv, w_proj, b_proj):
    """Pack per-head weights ONCE at init (hoisted out of the per-call path).

    wq/wk/wv: (H, C, hs) stacked per-head weights (already transposed vs torch).
    Returns (w_qkv (C, 3*H*hs), w_proj (H*hs, C), bias (1, C)).
    """
    H, C, hs = wq.shape
    HH = H * hs

    def _flat(w):  # (H, C, hs) -> (C, H*hs); head h lives at columns h*hs:(h+1)*hs
        return jnp.transpose(w, (1, 0, 2)).reshape(C, HH)

    w_qkv = jnp.concatenate([_flat(wq), _flat(wk), _flat(wv)], axis=1)
    return w_qkv, w_proj, b_proj.reshape(1, C)


@functools.partial(jax.jit, static_argnames=("num_heads", "head_size"))
def multi_head_attention(x, w_qkv, w_proj, b2d, *, num_heads, head_size):
    """
    x:      (B, T, C)
    w_qkv:  (C, 3*H*hs)  packed QKV weight (from pack_mha_params)
    w_proj: (H*hs, C)
    b2d:    (1, C)
    returns (B, T, C)
    """
    B, T, C = x.shape
    H, hs = num_heads, head_size
    HH = H * hs
    BT = B * T

    xf = x.reshape(BT, C)   # flatten batch*seq into the sublane dim: one slab, one DMA

    kernel = functools.partial(_mha_fused_kernel, batch=B, seq_len=T,
                               num_heads=H, head_size=hs, n_embd=C)

    yf = pl.pallas_call(
        kernel,
        out_shape=jax.ShapeDtypeStruct((BT, C), x.dtype),
        grid_spec=pltpu.PrefetchScalarGridSpec(
            num_scalar_prefetch=0,
            grid=(1,),                                            # single step
            in_specs=[
                pl.BlockSpec((BT, C), lambda i: (0, 0)),          # x (whole batch)
                pl.BlockSpec((C, 3 * HH), lambda i: (0, 0)),      # W_qkv (resident)
                pl.BlockSpec((HH, C), lambda i: (0, 0)),          # W_proj (resident)
                pl.BlockSpec((1, C), lambda i: (0, 0)),           # bias
            ],
            out_specs=pl.BlockSpec((BT, C), lambda i: (0, 0)),    # single output slab
        ),
    )(xf, w_qkv, w_proj, b2d)

    return yf.reshape(B, T, C)


def reference_mha(x, wq, wk, wv, w_proj, b_proj):
    """Pure-JAX reference mirroring the PyTorch forward (dropout=0)."""
    B, T, C = x.shape
    H, _, hs = wq.shape
    outs = []
    for h in range(H):
        q = x @ wq[h]
        k = x @ wk[h]
        v = x @ wv[h]
        wei = (q @ jnp.swapaxes(k, -1, -2)) * (C ** -0.5)
        wei = jax.nn.softmax(wei, axis=-1)
        outs.append(wei @ v)
    cat = jnp.concatenate(outs, axis=-1)
    return cat @ w_proj + b_proj


if __name__ == "__main__":
    # Small shapes consistent with the module: B=2, T=8, n_embd=32, 4 heads of size 8.
    B, T, n_embd = 2, 8, 32
    num_heads, head_size = 4, 8

    key = jax.random.PRNGKey(0)
    kx, kq, kk, kv, kp, kb = jax.random.split(key, 6)

    x = jax.random.normal(kx, (B, T, n_embd), dtype=jnp.float32)

    # Per-head Linear(n_embd, head_size, bias=False): torch weight (hs, C) stored
    # transposed (C, hs), stacked over heads.
    scale_in = 1.0 / jnp.sqrt(jnp.float32(n_embd))
    wq = jax.random.uniform(kq, (num_heads, n_embd, head_size), jnp.float32,
                            -scale_in, scale_in)
    wk = jax.random.uniform(kk, (num_heads, n_embd, head_size), jnp.float32,
                            -scale_in, scale_in)
    wv = jax.random.uniform(kv, (num_heads, n_embd, head_size), jnp.float32,
                            -scale_in, scale_in)

    # proj: Linear(H*hs, n_embd) — stored transposed (H*hs, C), plus bias.
    scale_p = 1.0 / jnp.sqrt(jnp.float32(num_heads * head_size))
    w_proj = jax.random.uniform(kp, (num_heads * head_size, n_embd), jnp.float32,
                                -scale_p, scale_p)
    b_proj = jax.random.uniform(kb, (n_embd,), jnp.float32, -scale_p, scale_p)

    # Pack weights once at init (hoisted out of the per-call path).
    w_qkv, w_proj_packed, b2d = pack_mha_params(wq, wk, wv, w_proj, b_proj)

    out = multi_head_attention(x, w_qkv, w_proj_packed, b2d,
                               num_heads=num_heads, head_size=head_size)
    out = jax.block_until_ready(out)

    ref = reference_mha(x, wq, wk, wv, w_proj, b_proj)
    assert out.shape == (B, T, n_embd)
    # Tolerance accounts for the EUP approximate reciprocal in the softmax.
    assert jnp.allclose(out, ref, atol=2e-3, rtol=2e-3), "mismatch vs reference"

    print("KERNEL_OK")
</pallas_src>

<mosaic_0001>
module attributes {stable_mosaic.version = 11 : i64} {
  func.func @_mha_fused_kernel(%arg0: i32, %arg1: memref<16x32xf32, #tpu.memory_space<vmem>>, %arg2: memref<32x96xf32, #tpu.memory_space<vmem>>, %arg3: memref<32x32xf32, #tpu.memory_space<vmem>>, %arg4: memref<1x32xf32, #tpu.memory_space<vmem>>, %arg5: memref<16x32xf32, #tpu.memory_space<vmem>>) attributes {dimension_semantics = [#tpu.dimension_semantics<arbitrary>], iteration_bounds = array<i64: 1>, scalar_prefetch = 0 : i64, scratch_operands = 0 : i64, tpu.core_type = #tpu.core_type<tc>, window_params = [{pipeline_mode = #tpu.pipeline_mode<synchronous>, transform_indices = @transform_0, window_bounds = array<i64: 16, 32>}, {pipeline_mode = #tpu.pipeline_mode<synchronous>, transform_indices = @transform_1, window_bounds = array<i64: 32, 96>}, {pipeline_mode = #tpu.pipeline_mode<synchronous>, transform_indices = @transform_2, window_bounds = array<i64: 32, 32>}, {pipeline_mode = #tpu.pipeline_mode<synchronous>, transform_indices = @transform_3, window_bounds = array<i64: 1, 32>}, {pipeline_mode = #tpu.pipeline_mode<synchronous>, transform_indices = @transform_4, window_bounds = array<i64: 16, 32>}]} {
    %c0 = arith.constant 0 : index
    %c0_0 = arith.constant 0 : index
    %0 = vector.load %arg1[%c0, %c0_0] : memref<16x32xf32, #tpu.memory_space<vmem>>, vector<16x32xf32>
    %c0_1 = arith.constant 0 : index
    %c0_2 = arith.constant 0 : index
    %1 = vector.load %arg2[%c0_1, %c0_2] : memref<32x96xf32, #tpu.memory_space<vmem>>, vector<32x96xf32>
    %c0_3 = arith.constant 0 : index
    %c0_4 = arith.constant 0 : index
    %2 = vector.load %arg3[%c0_3, %c0_4] : memref<32x32xf32, #tpu.memory_space<vmem>>, vector<32x32xf32>
    %cst = arith.constant dense<0.000000e+00> : vector<16x96xf32>
    %3 = tpu.matmul %0, %1, %cst {dimension_numbers = #tpu.dot_dimension_numbers<[1], [0], [0], [1], [0, 0, 1, 1], [], []>} : vector<16x32xf32>, vector<32x96xf32>, vector<16x96xf32> -> vector<16x96xf32>
    %cst_5 = arith.constant 3.200000e+01 : f32
    %cst_6 = arith.constant -5.000000e-01 : f32
    %4 = math.powf %cst_5, %cst_6 : f32
    %5 = vector.extract_strided_slice %3 {offsets = [0, 0], sizes = [16, 8], strides = [1, 1]} : vector<16x96xf32> to vector<16x8xf32>
    %6 = vector.extract_strided_slice %3 {offsets = [0, 32], sizes = [16, 8], strides = [1, 1]} : vector<16x96xf32> to vector<16x8xf32>
    %7 = vector.extract_strided_slice %3 {offsets = [0, 64], sizes = [16, 8], strides = [1, 1]} : vector<16x96xf32> to vector<16x8xf32>
    %8 = vector.extract_strided_slice %5 {offsets = [0, 0], sizes = [8, 8], strides = [1, 1]} : vector<16x8xf32> to vector<8x8xf32>
    %9 = vector.extract_strided_slice %6 {offsets = [0, 0], sizes = [8, 8], strides = [1, 1]} : vector<16x8xf32> to vector<8x8xf32>
    %10 = vector.extract_strided_slice %7 {offsets = [0, 0], sizes = [8, 8], strides = [1, 1]} : vector<16x8xf32> to vector<8x8xf32>
    %cst_7 = arith.constant dense<0.000000e+00> : vector<8x8xf32>
    %11 = tpu.matmul %8, %9, %cst_7 {dimension_numbers = #tpu.dot_dimension_numbers<[1], [1], [0], [0], [0, 0, 1, 0], [], []>} : vector<8x8xf32>, vector<8x8xf32>, vector<8x8xf32> -> vector<8x8xf32>
    %12 = vector.broadcast %4 : f32 to vector<8x8xf32>
    %13 = arith.mulf %11, %12 : vector<8x8xf32>
    %cst_8 = arith.constant dense<0xFF800000> : vector<8xf32>
    %14 = vector.multi_reduction <maximumf>, %13, %cst_8 [1] : vector<8x8xf32> to vector<8xf32>
    %15 = vector.shape_cast %14 : vector<8xf32> to vector<8x1xf32>
    %16 = vector.broadcast %15 : vector<8x1xf32> to vector<8x8xf32>
    %17 = arith.subf %13, %16 : vector<8x8xf32>
    %18 = math.exp %17 : vector<8x8xf32>
    %cst_9 = arith.constant dense<0.000000e+00> : vector<8xf32>
    %19 = vector.multi_reduction <add>, %18, %cst_9 [1] : vector<8x8xf32> to vector<8xf32>
    %20 = vector.shape_cast %19 : vector<8xf32> to vector<8x1xf32>
    %21 = tpu.reciprocal %20 {approx = true} : vector<8x1xf32> -> vector<8x1xf32>
    %22 = vector.broadcast %21 : vector<8x1xf32> to vector<8x8xf32>
    %23 = arith.mulf %18, %22 : vector<8x8xf32>
    %cst_10 = arith.constant dense<0.000000e+00> : vector<8x8xf32>
    %24 = tpu.matmul %23, %10, %cst_10 {dimension_numbers = #tpu.dot_dimension_numbers<[1], [0], [0], [1], [0, 0, 1, 1], [], []>} : vector<8x8xf32>, vector<8x8xf32>, vector<8x8xf32> -> vector<8x8xf32>
    %25 = vector.extract_strided_slice %5 {offsets = [8, 0], sizes = [8, 8], strides = [1, 1]} : vector<16x8xf32> to vector<8x8xf32>
    %26 = vector.extract_strided_slice %6 {offsets = [8, 0], sizes = [8, 8], strides = [1, 1]} : vector<16x8xf32> to vector<8x8xf32>
    %27 = vector.extract_strided_slice %7 {offsets = [8, 0], sizes = [8, 8], strides = [1, 1]} : vector<16x8xf32> to vector<8x8xf32>
    %cst_11 = arith.constant dense<0.000000e+00> : vector<8x8xf32>
    %28 = tpu.matmul %25, %26, %cst_11 {dimension_numbers = #tpu.dot_dimension_numbers<[1], [1], [0], [0], [0, 0, 1, 0], [], []>} : vector<8x8xf32>, vector<8x8xf32>, vector<8x8xf32> -> vector<8x8xf32>
    %29 = vector.broadcast %4 : f32 to vector<8x8xf32>
    %30 = arith.mulf %28, %29 : vector<8x8xf32>
    %cst_12 = arith.constant dense<0xFF800000> : vector<8xf32>
    %31 = vector.multi_reduction <maximumf>, %30, %cst_12 [1] : vector<8x8xf32> to vector<8xf32>
    %32 = vector.shape_cast %31 : vector<8xf32> to vector<8x1xf32>
    %33 = vector.broadcast %32 : vector<8x1xf32> to vector<8x8xf32>
    %34 = arith.subf %30, %33 : vector<8x8xf32>
    %35 = math.exp %34 : vector<8x8xf32>
    %cst_13 = arith.constant dense<0.000000e+00> : vector<8xf32>
    %36 = vector.multi_reduction <add>, %35, %cst_13 [1] : vector<8x8xf32> to vector<8xf32>
    %37 = vector.shape_cast %36 : vector<8xf32> to vector<8x1xf32>
    %38 = tpu.reciprocal %37 {approx = true} : vector<8x1xf32> -> vector<8x1xf32>
    %39 = vector.broadcast %38 : vector<8x1xf32> to vector<8x8xf32>
    %40 = arith.mulf %35, %39 : vector<8x8xf32>
    %cst_14 = arith.constant dense<0.000000e+00> : vector<8x8xf32>
    %41 = tpu.matmul %40, %27, %cst_14 {dimension_numbers = #tpu.dot_dimension_numbers<[1], [0], [0], [1], [0, 0, 1, 1], [], []>} : vector<8x8xf32>, vector<8x8xf32>, vector<8x8xf32> -> vector<8x8xf32>
    %42 = tpu.concatenate %24, %41 in 0 : vector<8x8xf32>, vector<8x8xf32> -> vector<16x8xf32>
    %43 = vector.extract_strided_slice %3 {offsets = [0, 8], sizes = [16, 8], strides = [1, 1]} : vector<16x96xf32> to vector<16x8xf32>
    %44 = vector.extract_strided_slice %3 {offsets = [0, 40], sizes = [16, 8], strides = [1, 1]} : vector<16x96xf32> to vector<16x8xf32>
    %45 = vector.extract_strided_slice %3 {offsets = [0, 72], sizes = [16, 8], strides = [1, 1]} : vector<16x96xf32> to vector<16x8xf32>
    %46 = vector.extract_strided_slice %43 {offsets = [0, 0], sizes = [8, 8], strides = [1, 1]} : vector<16x8xf32> to vector<8x8xf32>
    %47 = vector.extract_strided_slice %44 {offsets = [0, 0], sizes = [8, 8], strides = [1, 1]} : vector<16x8xf32> to vector<8x8xf32>
    %48 = vector.extract_strided_slice %45 {offsets = [0, 0], sizes = [8, 8], strides = [1, 1]} : vector<16x8xf32> to vector<8x8xf32>
    %cst_15 = arith.constant dense<0.000000e+00> : vector<8x8xf32>
    %49 = tpu.matmul %46, %47, %cst_15 {dimension_numbers = #tpu.dot_dimension_numbers<[1], [1], [0], [0], [0, 0, 1, 0], [], []>} : vector<8x8xf32>, vector<8x8xf32>, vector<8x8xf32> -> vector<8x8xf32>
    %50 = vector.broadcast %4 : f32 to vector<8x8xf32>
    %51 = arith.mulf %49, %50 : vector<8x8xf32>
    %cst_16 = arith.constant dense<0xFF800000> : vector<8xf32>
    %52 = vector.multi_reduction <maximumf>, %51, %cst_16 [1] : vector<8x8xf32> to vector<8xf32>
    %53 = vector.shape_cast %52 : vector<8xf32> to vector<8x1xf32>
    %54 = vector.broadcast %53 : vector<8x1xf32> to vector<8x8xf32>
    %55 = arith.subf %51, %54 : vector<8x8xf32>
    %56 = math.exp %55 : vector<8x8xf32>
    %cst_17 = arith.constant dense<0.000000e+00> : vector<8xf32>
    %57 = vector.multi_reduction <add>, %56, %cst_17 [1] : vector<8x8xf32> to vector<8xf32>
    %58 = vector.shape_cast %57 : vector<8xf32> to vector<8x1xf32>
    %59 = tpu.reciprocal %58 {approx = true} : vector<8x1xf32> -> vector<8x1xf32>
    %60 = vector.broadcast %59 : vector<8x1xf32> to vector<8x8xf32>
    %61 = arith.mulf %56, %60 : vector<8x8xf32>
    %cst_18 = arith.constant dense<0.000000e+00> : vector<8x8xf32>
    %62 = tpu.matmul %61, %48, %cst_18 {dimension_numbers = #tpu.dot_dimension_numbers<[1], [0], [0], [1], [0, 0, 1, 1], [], []>} : vector<8x8xf32>, vector<8x8xf32>, vector<8x8xf32> -> vector<8x8xf32>
    %63 = vector.extract_strided_slice %43 {offsets = [8, 0], sizes = [8, 8], strides = [1, 1]} : vector<16x8xf32> to vector<8x8xf32>
    %64 = vector.extract_strided_slice %44 {offsets = [8, 0], sizes = [8, 8], strides = [1, 1]} : vector<16x8xf32> to vector<8x8xf32>
    %65 = vector.extract_strided_slice %45 {offsets = [8, 0], sizes = [8, 8], strides = [1, 1]} : vector<16x8xf32> to vector<8x8xf32>
    %cst_19 = arith.constant dense<0.000000e+00> : vector<8x8xf32>
    %66 = tpu.matmul %63, %64, %cst_19 {dimension_numbers = #tpu.dot_dimension_numbers<[1], [1], [0], [0], [0, 0, 1, 0], [], []>} : vector<8x8xf32>, vector<8x8xf32>, vector<8x8xf32> -> vector<8x8xf32>
    %67 = vector.broadcast %4 : f32 to vector<8x8xf32>
    %68 = arith.mulf %66, %67 : vector<8x8xf32>
    %cst_20 = arith.constant dense<0xFF800000> : vector<8xf32>
    %69 = vector.multi_reduction <maximumf>, %68, %cst_20 [1] : vector<8x8xf32> to vector<8xf32>
    %70 = vector.shape_cast %69 : vector<8xf32> to vector<8x1xf32>
    %71 = vector.broadcast %70 : vector<8x1xf32> to vector<8x8xf32>
    %72 = arith.subf %68, %71 : vector<8x8xf32>
    %73 = math.exp %72 : vector<8x8xf32>
    %cst_21 = arith.constant dense<0.000000e+00> : vector<8xf32>
    %74 = vector.multi_reduction <add>, %73, %cst_21 [1] : vector<8x8xf32> to vector<8xf32>
    %75 = vector.shape_cast %74 : vector<8xf32> to vector<8x1xf32>
    %76 = tpu.reciprocal %75 {approx = true} : vector<8x1xf32> -> vector<8x1xf32>
    %77 = vector.broadcast %76 : vector<8x1xf32> to vector<8x8xf32>
    %78 = arith.mulf %73, %77 : vector<8x8xf32>
    %cst_22 = arith.constant dense<0.000000e+00> : vector<8x8xf32>
    %79 = tpu.matmul %78, %65, %cst_22 {dimension_numbers = #tpu.dot_dimension_numbers<[1], [0], [0], [1], [0, 0, 1, 1], [], []>} : vector<8x8xf32>, vector<8x8xf32>, vector<8x8xf32> -> vector<8x8xf32>
    %80 = tpu.concatenate %62, %79 in 0 : vector<8x8xf32>, vector<8x8xf32> -> vector<16x8xf32>
    %81 = vector.extract_strided_slice %3 {offsets = [0, 16], sizes = [16, 8], strides = [1, 1]} : vector<16x96xf32> to vector<16x8xf32>
    %82 = vector.extract_strided_slice %3 {offsets = [0, 48], sizes = [16, 8], strides = [1, 1]} : vector<16x96xf32> to vector<16x8xf32>
    %83 = vector.extract_strided_slice %3 {offsets = [0, 80], sizes = [16, 8], strides = [1, 1]} : vector<16x96xf32> to vector<16x8xf32>
    %84 = vector.extract_strided_slice %81 {offsets = [0, 0], sizes = [8, 8], strides = [1, 1]} : vector<16x8xf32> to vector<8x8xf32>
    %85 = vector.extract_strided_slice %82 {offsets = [0, 0], sizes = [8, 8], strides = [1, 1]} : vector<16x8xf32> to vector<8x8xf32>
    %86 = vector.extract_strided_slice %83 {offsets = [0, 0], sizes = [8, 8], strides = [1, 1]} : vector<16x8xf32> to vector<8x8xf32>
    %cst_23 = arith.constant dense<0.000000e+00> : vector<8x8xf32>
    %87 = tpu.matmul %84, %85, %cst_23 {dimension_numbers = #tpu.dot_dimension_numbers<[1], [1], [0], [0], [0, 0, 1, 0], [], []>} : vector<8x8xf32>, vector<8x8xf32>, vector<8x8xf32> -> vector<8x8xf32>
    %88 = vector.broadcast %4 : f32 to vector<8x8xf32>
    %89 = arith.mulf %87, %88 : vector<8x8xf32>
    %cst_24 = arith.constant dense<0xFF800000> : vector<8xf32>
    %90 = vector.multi_reduction <maximumf>, %89, %cst_24 [1] : vector<8x8xf32> to vector<8xf32>
    %91 = vector.shape_cast %90 : vector<8xf32> to vector<8x1xf32>
    %92 = vector.broadcast %91 : vector<8x1xf32> to vector<8x8xf32>
    %93 = arith.subf %89, %92 : vector<8x8xf32>
    %94 = math.exp %93 : vector<8x8xf32>
    %cst_25 = arith.constant dense<0.000000e+00> : vector<8xf32>
    %95 = vector.multi_reduction <add>, %94, %cst_25 [1] : vector<8x8xf32> to vector<8xf32>
    %96 = vector.shape_cast %95 : vector<8xf32> to vector<8x1xf32>
    %97 = tpu.reciprocal %96 {approx = true} : vector<8x1xf32> -> vector<8x1xf32>
    %98 = vector.broadcast %97 : vector<8x1xf32> to vector<8x8xf32>
    %99 = arith.mulf %94, %98 : vector<8x8xf32>
    %cst_26 = arith.constant dense<0.000000e+00> : vector<8x8xf32>
    %100 = tpu.matmul %99, %86, %cst_26 {dimension_numbers = #tpu.dot_dimension_numbers<[1], [0], [0], [1], [0, 0, 1, 1], [], []>} : vector<8x8xf32>, vector<8x8xf32>, vector<8x8xf32> -> vector<8x8xf32>
    %101 = vector.extract_strided_slice %81 {offsets = [8, 0], sizes = [8, 8], strides = [1, 1]} : vector<16x8xf32> to vector<8x8xf32>
    %102 = vector.extract_strided_slice %82 {offsets = [8, 0], sizes = [8, 8], strides = [1, 1]} : vector<16x8xf32> to vector<8x8xf32>
    %103 = vector.extract_strided_slice %83 {offsets = [8, 0], sizes = [8, 8], strides = [1, 1]} : vector<16x8xf32> to vector<8x8xf32>
    %cst_27 = arith.constant dense<0.000000e+00> : vector<8x8xf32>
    %104 = tpu.matmul %101, %102, %cst_27 {dimension_numbers = #tpu.dot_dimension_numbers<[1], [1], [0], [0], [0, 0, 1, 0], [], []>} : vector<8x8xf32>, vector<8x8xf32>, vector<8x8xf32> -> vector<8x8xf32>
    %105 = vector.broadcast %4 : f32 to vector<8x8xf32>
    %106 = arith.mulf %104, %105 : vector<8x8xf32>
    %cst_28 = arith.constant dense<0xFF800000> : vector<8xf32>
    %107 = vector.multi_reduction <maximumf>, %106, %cst_28 [1] : vector<8x8xf32> to vector<8xf32>
    %108 = vector.shape_cast %107 : vector<8xf32> to vector<8x1xf32>
    %109 = vector.broadcast %108 : vector<8x1xf32> to vector<8x8xf32>
    %110 = arith.subf %106, %109 : vector<8x8xf32>
    %111 = math.exp %110 : vector<8x8xf32>
    %cst_29 = arith.constant dense<0.000000e+00> : vector<8xf32>
    %112 = vector.multi_reduction <add>, %111, %cst_29 [1] : vector<8x8xf32> to vector<8xf32>
    %113 = vector.shape_cast %112 : vector<8xf32> to vector<8x1xf32>
    %114 = tpu.reciprocal %113 {approx = true} : vector<8x1xf32> -> vector<8x1xf32>
    %115 = vector.broadcast %114 : vector<8x1xf32> to vector<8x8xf32>
    %116 = arith.mulf %111, %115 : vector<8x8xf32>
    %cst_30 = arith.constant dense<0.000000e+00> : vector<8x8xf32>
    %117 = tpu.matmul %116, %103, %cst_30 {dimension_numbers = #tpu.dot_dimension_numbers<[1], [0], [0], [1], [0, 0, 1, 1], [], []>} : vector<8x8xf32>, vector<8x8xf32>, vector<8x8xf32> -> vector<8x8xf32>
    %118 = tpu.concatenate %100, %117 in 0 : vector<8x8xf32>, vector<8x8xf32> -> vector<16x8xf32>
    %119 = vector.extract_strided_slice %3 {offsets = [0, 24], sizes = [16, 8], strides = [1, 1]} : vector<16x96xf32> to vector<16x8xf32>
    %120 = vector.extract_strided_slice %3 {offsets = [0, 56], sizes = [16, 8], strides = [1, 1]} : vector<16x96xf32> to vector<16x8xf32>
    %121 = vector.extract_strided_slice %3 {offsets = [0, 88], sizes = [16, 8], strides = [1, 1]} : vector<16x96xf32> to vector<16x8xf32>
    %122 = vector.extract_strided_slice %119 {offsets = [0, 0], sizes = [8, 8], strides = [1, 1]} : vector<16x8xf32> to vector<8x8xf32>
    %123 = vector.extract_strided_slice %120 {offsets = [0, 0], sizes = [8, 8], strides = [1, 1]} : vector<16x8xf32> to vector<8x8xf32>
    %124 = vector.extract_strided_slice %121 {offsets = [0, 0], sizes = [8, 8], strides = [1, 1]} : vector<16x8xf32> to vector<8x8xf32>
    %cst_31 = arith.constant dense<0.000000e+00> : vector<8x8xf32>
    %125 = tpu.matmul %122, %123, %cst_31 {dimension_numbers = #tpu.dot_dimension_numbers<[1], [1], [0], [0], [0, 0, 1, 0], [], []>} : vector<8x8xf32>, vector<8x8xf32>, vector<8x8xf32> -> vector<8x8xf32>
    %126 = vector.broadcast %4 : f32 to vector<8x8xf32>
    %127 = arith.mulf %125, %126 : vector<8x8xf32>
    %cst_32 = arith.constant dense<0xFF800000> : vector<8xf32>
    %128 = vector.multi_reduction <maximumf>, %127, %cst_32 [1] : vector<8x8xf32> to vector<8xf32>
    %129 = vector.shape_cast %128 : vector<8xf32> to vector<8x1xf32>
    %130 = vector.broadcast %129 : vector<8x1xf32> to vector<8x8xf32>
    %131 = arith.subf %127, %130 : vector<8x8xf32>
    %132 = math.exp %131 : vector<8x8xf32>
    %cst_33 = arith.constant dense<0.000000e+00> : vector<8xf32>
    %133 = vector.multi_reduction <add>, %132, %cst_33 [1] : vector<8x8xf32> to vector<8xf32>
    %134 = vector.shape_cast %133 : vector<8xf32> to vector<8x1xf32>
    %135 = tpu.reciprocal %134 {approx = true} : vector<8x1xf32> -> vector<8x1xf32>
    %136 = vector.broadcast %135 : vector<8x1xf32> to vector<8x8xf32>
    %137 = arith.mulf %132, %136 : vector<8x8xf32>
    %cst_34 = arith.constant dense<0.000000e+00> : vector<8x8xf32>
    %138 = tpu.matmul %137, %124, %cst_34 {dimension_numbers = #tpu.dot_dimension_numbers<[1], [0], [0], [1], [0, 0, 1, 1], [], []>} : vector<8x8xf32>, vector<8x8xf32>, vector<8x8xf32> -> vector<8x8xf32>
    %139 = vector.extract_strided_slice %119 {offsets = [8, 0], sizes = [8, 8], strides = [1, 1]} : vector<16x8xf32> to vector<8x8xf32>
    %140 = vector.extract_strided_slice %120 {offsets = [8, 0], sizes = [8, 8], strides = [1, 1]} : vector<16x8xf32> to vector<8x8xf32>
    %141 = vector.extract_strided_slice %121 {offsets = [8, 0], sizes = [8, 8], strides = [1, 1]} : vector<16x8xf32> to vector<8x8xf32>
    %cst_35 = arith.constant dense<0.000000e+00> : vector<8x8xf32>
    %142 = tpu.matmul %139, %140, %cst_35 {dimension_numbers = #tpu.dot_dimension_numbers<[1], [1], [0], [0], [0, 0, 1, 0], [], []>} : vector<8x8xf32>, vector<8x8xf32>, vector<8x8xf32> -> vector<8x8xf32>
    %143 = vector.broadcast %4 : f32 to vector<8x8xf32>
    %144 = arith.mulf %142, %143 : vector<8x8xf32>
    %cst_36 = arith.constant dense<0xFF800000> : vector<8xf32>
    %145 = vector.multi_reduction <maximumf>, %144, %cst_36 [1] : vector<8x8xf32> to vector<8xf32>
    %146 = vector.shape_cast %145 : vector<8xf32> to vector<8x1xf32>
    %147 = vector.broadcast %146 : vector<8x1xf32> to vector<8x8xf32>
    %148 = arith.subf %144, %147 : vector<8x8xf32>
    %149 = math.exp %148 : vector<8x8xf32>
    %cst_37 = arith.constant dense<0.000000e+00> : vector<8xf32>
    %150 = vector.multi_reduction <add>, %149, %cst_37 [1] : vector<8x8xf32> to vector<8xf32>
    %151 = vector.shape_cast %150 : vector<8xf32> to vector<8x1xf32>
    %152 = tpu.reciprocal %151 {approx = true} : vector<8x1xf32> -> vector<8x1xf32>
    %153 = vector.broadcast %152 : vector<8x1xf32> to vector<8x8xf32>
    %154 = arith.mulf %149, %153 : vector<8x8xf32>
    %cst_38 = arith.constant dense<0.000000e+00> : vector<8x8xf32>
    %155 = tpu.matmul %154, %141, %cst_38 {dimension_numbers = #tpu.dot_dimension_numbers<[1], [0], [0], [1], [0, 0, 1, 1], [], []>} : vector<8x8xf32>, vector<8x8xf32>, vector<8x8xf32> -> vector<8x8xf32>
    %156 = tpu.concatenate %138, %155 in 0 : vector<8x8xf32>, vector<8x8xf32> -> vector<16x8xf32>
    %157 = tpu.concatenate %42, %80, %118, %156 in 1 : vector<16x8xf32>, vector<16x8xf32>, vector<16x8xf32>, vector<16x8xf32> -> vector<16x32xf32>
    %cst_39 = arith.constant dense<0.000000e+00> : vector<16x32xf32>
    %158 = tpu.matmul %157, %2, %cst_39 {dimension_numbers = #tpu.dot_dimension_numbers<[1], [0], [0], [1], [0, 0, 1, 1], [], []>} : vector<16x32xf32>, vector<32x32xf32>, vector<16x32xf32> -> vector<16x32xf32>
    %c0_40 = arith.constant 0 : index
    %c0_41 = arith.constant 0 : index
    %159 = vector.load %arg4[%c0_40, %c0_41] : memref<1x32xf32, #tpu.memory_space<vmem>>, vector<1x32xf32>
    %160 = vector.broadcast %159 : vector<1x32xf32> to vector<16x32xf32>
    %161 = arith.addf %158, %160 : vector<16x32xf32>
    %c0_42 = arith.constant 0 : index
    %c0_43 = arith.constant 0 : index
    %162 = vector.load %arg5[%c0_42, %c0_43] : memref<16x32xf32, #tpu.memory_space<vmem>>, vector<16x32xf32>
    tpu.vector_store %arg5[%c0_42, %c0_43], %161 {strides = array<i32>} : memref<16x32xf32, #tpu.memory_space<vmem>>, vector<16x32xf32>,
    return
  }
  func.func @transform_0(%arg0: i32) -> (i32, i32) {
    %c0_i32 = arith.constant 0 : i32
    %c0_i32_0 = arith.constant 0 : i32
    %c0_i32_1 = arith.constant 0 : i32
    return %c0_i32, %c0_i32_0 : i32, i32
  }
  func.func @transform_1(%arg0: i32) -> (i32, i32) {
    %c0_i32 = arith.constant 0 : i32
    %c0_i32_0 = arith.constant 0 : i32
    %c0_i32_1 = arith.constant 0 : i32
    return %c0_i32, %c0_i32_0 : i32, i32
  }
  func.func @transform_2(%arg0: i32) -> (i32, i32) {
    %c0_i32 = arith.constant 0 : i32
    %c0_i32_0 = arith.constant 0 : i32
    %c0_i32_1 = arith.constant 0 : i32
    return %c0_i32, %c0_i32_0 : i32, i32
  }
  func.func @transform_3(%arg0: i32) -> (i32, i32) {
    %c0_i32 = arith.constant 0 : i32
    %c0_i32_0 = arith.constant 0 : i32
    %c0_i32_1 = arith.constant 0 : i32
    return %c0_i32, %c0_i32_0 : i32, i32
  }
  func.func @transform_4(%arg0: i32) -> (i32, i32) {
    %c0_i32 = arith.constant 0 : i32
    %c0_i32_0 = arith.constant 0 : i32
    %c0_i32_1 = arith.constant 0 : i32
    return %c0_i32, %c0_i32_0 : i32, i32
  }
}

</mosaic_0001>

<llo_original>
// kernel: multi_head_attention.1
$region0: #{multi_head_attention.1}
  #allocation0 [shape = 'u32[]', space=smem, size = 0x4, offset = 0x4, fixed_abs, tag = 'smem constant byte address 0x4 - core index']
  #allocation1 [shape = 'u32[144,128]{1,0:T(1,128)}', space=vmem, size = 0x12000, scoped, tag = 'internal scratch']
  %s0 = inlined_call_operand.hbm [shape: f32[16,32], index: 0, kind: input, shape index: {}]
  %s1 = inlined_call_operand.hbm [shape: f32[32,96], index: 1, kind: input, shape index: {}]
  %s2 = inlined_call_operand.hbm [shape: f32[32,32], index: 2, kind: input, shape index: {}]
  %s3 = inlined_call_operand.vmem [shape: f32[1,32], index: 3, kind: input, shape index: {}]
  %s4 = inlined_call_operand.hbm [shape: f32[16,32], index: 4, kind: output, shape index: {}]
  %s5 = sld [smem:[#allocation0]]
  $region38: #{multi_head_attention.1} parent=0
    _
  %s7 = ssub.s32 1, %s5
  %s8 = scalar_select 0, %s7, %s5
  $region1: #{multi_head_attention.1} parent=0
    #allocation2 [shape = 'u8[8192]{0}', space=vmem, size = 0x2000, scoped, tag = 'input window, operand 0, single buffered']
    #allocation3 [shape = 's32[1]{0}', space=sflag, size = 0x4, scoped, tag = 'scoped memory for multi_head_attention.1']
    #allocation4 [shape = 's32[1]{0}', space=sflag, size = 0x4, scoped, tag = 'scoped memory for multi_head_attention.1']
    #allocation5 [shape = 'u8[16384]{0}', space=vmem, size = 0x4000, scoped, tag = 'input window, operand 1, single buffered']
    #allocation6 [shape = 's32[1]{0}', space=sflag, size = 0x4, scoped, tag = 'scoped memory for multi_head_attention.1']
    #allocation7 [shape = 'u8[16384]{0}', space=vmem, size = 0x4000, scoped, tag = 'input window, operand 2, single buffered']
    #allocation8 [shape = 'u8[8192]{0}', space=vmem, size = 0x2000, scoped, tag = 'output window, operand 0, single buffered']
    %9 = vsyncpa [#allocation3], 0
    %10 = vsyncpa [#allocation6], 0
    %11 = vsyncpa [#allocation4], 0
    // Predicated region
    $region2: #{multi_head_attention.1} parent=1 // pred_check
      _
    $region3: #{multi_head_attention.1} parent=1 // pred_check_branch
      %13 = sbr.rel (0) target = $region5
    $region4: #{multi_head_attention.1} parent=1 // pred_region
      %s15 = ssub.s32 256, 256
      %16 = vsyncadd [#allocation3], %s15
      %s17 = sshll.u32 [#allocation2], 4
      %s18 = int_to_ptr.vmem [resolvable:$true] %s17
      %23 = dma.hbm_to_vmem [thread:$0]  %s0, 256, %s18, [#allocation3], 128, 128, 8
    $region5: #{multi_head_attention.1} parent=1 // pred_fallthru
      _
    // Predicated region
    $region6: #{multi_head_attention.1} parent=1 // pred_check
      _
    $region7: #{multi_head_attention.1} parent=1 // pred_check_branch
      %25 = sbr.rel (0) target = $region9
    $region8: #{multi_head_attention.1} parent=1 // pred_region
      %s27 = ssub.s32 512, 512
      %28 = vsyncadd [#allocation6], %s27
      %s29 = sshll.u32 [#allocation5], 4
      %s30 = int_to_ptr.vmem [resolvable:$true] %s29
      %35 = dma.hbm_to_vmem [thread:$0]  %s1, 512, %s30, [#allocation6], 128, 128, 8
    $region9: #{multi_head_attention.1} parent=1 // pred_fallthru
      _
    // Predicated region
    $region10: #{multi_head_attention.1} parent=1 // pred_check
      _
    $region11: #{multi_head_attention.1} parent=1 // pred_check_branch
      %37 = sbr.rel (0) target = $region13
    $region12: #{multi_head_attention.1} parent=1 // pred_region
      %s39 = ssub.s32 512, 512
      %40 = vsyncadd [#allocation6], %s39
      %s41 = sshll.u32 [#allocation7], 4
      %s42 = int_to_ptr.vmem [resolvable:$true] %s41
      %47 = dma.hbm_to_vmem [thread:$0]  %s2, 512, %s42, [#allocation6], 128, 128, 8
    $region13: #{multi_head_attention.1} parent=1 // pred_fallthru
      _
    // Predicated region
    $region14: #{multi_head_attention.1} parent=1 // pred_check
      _
    $region15: #{multi_head_attention.1} parent=1 // pred_check_branch
      %49 = sbr.rel (0) target = $region17
    $region16: #{multi_head_attention.1} parent=1 // pred_region
      _
    $region17: #{multi_head_attention.1} parent=1 // pred_fallthru
      _
    // Predicated region
    $region18: #{multi_head_attention.1} parent=1 // pred_check
      _
    $region19: #{multi_head_attention.1} parent=1 // pred_check_branch
      %51 = sbr.rel (0) target = $region21
    $region20: #{multi_head_attention.1} parent=1 // pred_region
      %52 = dma.done [#allocation3], 256
    $region21: #{multi_head_attention.1} parent=1 // pred_fallthru
      _
    // Predicated region
    $region22: #{multi_head_attention.1} parent=1 // pred_check
      _
    $region23: #{multi_head_attention.1} parent=1 // pred_check_branch
      %54 = sbr.rel (0) target = $region25
    $region24: #{multi_head_attention.1} parent=1 // pred_region
      %55 = dma.done [#allocation6], 512
    $region25: #{multi_head_attention.1} parent=1 // pred_fallthru
      _
    // Predicated region
    $region26: #{multi_head_attention.1} parent=1 // pred_check
      _
    $region27: #{multi_head_attention.1} parent=1 // pred_check_branch
      %57 = sbr.rel (0) target = $region29
    $region28: #{multi_head_attention.1} parent=1 // pred_region
      %58 = dma.done [#allocation6], 512
    $region29: #{multi_head_attention.1} parent=1 // pred_fallthru
      _
    %v59 = vld [vmem:[#allocation2] sm:$0xff]
    %v60 = vld [vmem:[#allocation2 + $0x8] sm:$0xff]
    %v61 = vld [vmem:[#allocation5] sm:$0xff]
    %v62 = vld [vmem:[#allocation5 + $0x8] sm:$0xff]
    %v63 = vld [vmem:[#allocation5 + $0x10] sm:$0xff]
    %v64 = vld [vmem:[#allocation5 + $0x18] sm:$0xff]
    %v65 = vld [vmem:[#allocation7] sm:$0xff]
    %v66 = vld [vmem:[#allocation7 + $0x8] sm:$0xff]
    %v67 = vld [vmem:[#allocation7 + $0x10] sm:$0xff]
    %v68 = vld [vmem:[#allocation7 + $0x18] sm:$0xff]
    %vm69 = vcmask 261120
    %v71 = vsel %vm69, %v59, 0
    %v74 = vsel %vm69, %v60, 0
    %76 = vmatprep.subr.mxu0 0.0
    %77 = vmatpush1.msra.mxu0 %v61
    %78 = vmatprep.subr.mxu0 0.0
    %79 = vmatpush1.msra.mxu0 %v62
    %80 = vmatprep.subr.mxu0 0.0
    %81 = vmatpush1.msra.mxu0 %v63
    %82 = vmatprep.subr.mxu0 0.0
    %83 = vmatpush1.msra.mxu0 %v64
    %84 = vmatprep.subr.mxu0 0.0
    %85 = vmatpush1.msra.mxu0 0.0
    %86 = vmatprep.subr.mxu0 0.0
    %87 = vmatpush1.msra.mxu0 0.0
    %88 = vmatprep.subr.mxu0 0.0
    %89 = vmatpush1.msra.mxu0 0.0
    %90 = vmatprep.subr.mxu0 0.0
    %91 = vmatpush1.msra.mxu0 0.0
    %92 = vmatprep.subr.mxu0 0.0
    %93 = vmatpush1.msra.mxu0 0.0
    %94 = vmatprep.subr.mxu0 0.0
    %95 = vmatpush1.msra.mxu0 0.0
    %96 = vmatprep.subr.mxu0 0.0
    %97 = vmatpush1.msra.mxu0 0.0
    %98 = vmatprep.subr.mxu0 0.0
    %99 = vmatpush1.msra.mxu0 0.0
    %100 = vmatprep.subr.mxu0 0.0
    %101 = vmatpush1.msra.mxu0 0.0
    %102 = vmatprep.subr.mxu0 0.0
    %103 = vmatpush1.msra.mxu0 0.0
    %104 = vmatprep.subr.mxu0 0.0
    %105 = vmatpush1.msra.mxu0 0.0
    %106 = vmatprep.subr.mxu0 0.0
    %107 = vmatpush1.msra.mxu0 0.0
    %108 = vmatprep.subr.mxu0 0.0
    %109 = vmatpush1.msra.mxu0 0.0
    %110 = vmatprep.subr.mxu0 0.0
    %111 = vmatpush1.msra.mxu0 0.0
    %112 = vmatprep.subr.mxu0 0.0
    %113 = vmatpush1.msra.mxu0 0.0
    %114 = vmatprep.subr.mxu0 0.0
    %115 = vmatpush1.msra.mxu0 0.0
    %116 = vmatprep.subr.mxu0 0.0
    %117 = vmatpush1.msra.mxu0 0.0
    %118 = vmatprep.subr.mxu0 0.0
    %119 = vmatpush1.msra.mxu0 0.0
    %120 = vmatprep.subr.mxu0 0.0
    %121 = vmatpush1.msra.mxu0 0.0
    %122 = vmatprep.subr.mxu0 0.0
    %123 = vmatpush1.msra.mxu0 0.0
    %124 = vmatprep.subr.mxu0 0.0
    %125 = vmatpush1.msra.mxu0 0.0
    %126 = vmatprep.subr.mxu0 0.0
    %127 = vmatpush1.msra.mxu0 0.0
    %128 = vmatprep.subr.mxu0 0.0
    %129 = vmatpush1.msra.mxu0 0.0
    %130 = vmatprep.subr.mxu0 0.0
    %131 = vmatpush1.msra.mxu0 0.0
    %132 = vmatprep.subr.mxu0 0.0
    %133 = vmatpush1.msra.mxu0 0.0
    %134 = vmatprep.subr.mxu0 0.0
    %135 = vmatpush1.msra.mxu0 0.0
    %136 = vmatprep.subr.mxu0 0.0
    %137 = vmatpush1.msra.mxu0 0.0
    %138 = vmatprep.subr.mxu0 0.0
    %139 = vmatpush1.msra.mxu0 0.0
    %140 = vmatprep.mubr.f32.mxu0 0.0
    %141 = vmatmul.mubr.f32.gmra.mrb[0].mxu0 %v71
    %v142 = vpop.f32.mrb[0].mxu0
    %v143 = vadd.f32 0.0, %v142
    %v144 = vpop.f32.mrb[0].mxu0
    %145 = vmatprep.mubr.f32.mxu0 0.0
    %146 = vmatmul.mubr.f32.gmra.mrb[0].mxu0 %v74
    %v147 = vpop.f32.mrb[0].mxu0
    %v148 = vadd.f32 0.0, %v147
    %v149 = vpop.f32.mrb[0].mxu0
    %150 = vdwg.mxu0
    %152 = vrot.lane.b32.xlu0 %v143, 96
    %v153 = vpop.permute.xlu0 %152
    %vm154 = vcmask 64512
    %v155 = vsel %vm154, %v143, 0
    %v157 = vsel %vm154, %v153, 0
    %159 = vmatprep.subr.mxu0 0.0
    %160 = vmatpush1.xpose.msra.mxu0 %v157
    %161 = vmatprep.subr.mxu0 0.0
    %162 = vmatpush1.xpose.msra.mxu0 0.0
    %163 = vmatprep.subr.mxu0 0.0
    %164 = vmatpush1.xpose.msra.mxu0 0.0
    %165 = vmatprep.subr.mxu0 0.0
    %166 = vmatpush1.xpose.msra.mxu0 0.0
    %167 = vmatprep.subr.mxu0 0.0
    %168 = vmatpush1.xpose.msra.mxu0 0.0
    %169 = vmatprep.subr.mxu0 0.0
    %170 = vmatpush1.xpose.msra.mxu0 0.0
    %171 = vmatprep.subr.mxu0 0.0
    %172 = vmatpush1.xpose.msra.mxu0 0.0
    %173 = vmatprep.subr.mxu0 0.0
    %174 = vmatpush1.xpose.msra.mxu0 0.0
    %175 = vmatprep.subr.mxu0 0.0
    %176 = vmatpush1.xpose.msra.mxu0 0.0
    %177 = vmatprep.subr.mxu0 0.0
    %178 = vmatpush1.xpose.msra.mxu0 0.0
    %179 = vmatprep.subr.mxu0 0.0
    %180 = vmatpush1.xpose.msra.mxu0 0.0
    %181 = vmatprep.subr.mxu0 0.0
    %182 = vmatpush1.xpose.msra.mxu0 0.0
    %183 = vmatprep.subr.mxu0 0.0
    %184 = vmatpush1.xpose.msra.mxu0 0.0
    %185 = vmatprep.subr.mxu0 0.0
    %186 = vmatpush1.xpose.msra.mxu0 0.0
    %187 = vmatprep.subr.mxu0 0.0
    %188 = vmatpush1.xpose.msra.mxu0 0.0
    %189 = vmatprep.subr.mxu0 0.0
    %190 = vmatpush1.xpose.msra.mxu0 0.0
    %191 = vmatprep.subr.mxu0 0.0
    %192 = vmatpush1.xpose.msra.mxu0 0.0
    %193 = vmatprep.subr.mxu0 0.0
    %194 = vmatpush1.xpose.msra.mxu0 0.0
    %195 = vmatprep.subr.mxu0 0.0
    %196 = vmatpush1.xpose.msra.mxu0 0.0
    %197 = vmatprep.subr.mxu0 0.0
    %198 = vmatpush1.xpose.msra.mxu0 0.0
    %199 = vmatprep.subr.mxu0 0.0
    %200 = vmatpush1.xpose.msra.mxu0 0.0
    %201 = vmatprep.subr.mxu0 0.0
    %202 = vmatpush1.xpose.msra.mxu0 0.0
    %203 = vmatprep.subr.mxu0 0.0
    %204 = vmatpush1.xpose.msra.mxu0 0.0
    %205 = vmatprep.subr.mxu0 0.0
    %206 = vmatpush1.xpose.msra.mxu0 0.0
    %207 = vmatprep.subr.mxu0 0.0
    %208 = vmatpush1.xpose.msra.mxu0 0.0
    %209 = vmatprep.subr.mxu0 0.0
    %210 = vmatpush1.xpose.msra.mxu0 0.0
    %211 = vmatprep.subr.mxu0 0.0
    %212 = vmatpush1.xpose.msra.mxu0 0.0
    %213 = vmatprep.subr.mxu0 0.0
    %214 = vmatpush1.xpose.msra.mxu0 0.0
    %215 = vmatprep.subr.mxu0 0.0
    %216 = vmatpush1.xpose.msra.mxu0 0.0
    %217 = vmatprep.subr.mxu0 0.0
    %218 = vmatpush1.xpose.msra.mxu0 0.0
    %219 = vmatprep.subr.mxu0 0.0
    %220 = vmatpush1.xpose.msra.mxu0 0.0
    %221 = vmatprep.subr.mxu0 0.0
    %222 = vmatpush1.xpose.msra.mxu0 0.0
    %223 = vmatprep.mubr.f32.mxu0 0.0
    %224 = vmatmul.mubr.f32.gmra.mrb[0].mxu0 %v155
    %v225 = vpop.f32.mrb[0].mxu0
    %v226 = vadd.f32 0.0, %v225
    %v227 = vpop.f32.mrb[0].mxu0
    %228 = vdwg.mxu0
    %v229 = vmul.f32 %v226, 0.17677669
    %v230 = vsel %vm154, %v229, -inf
    %231 = vmax.xlane.f32.xlu0 %v230
    %v232 = vpop.xlane.xlu0 %231
    %v233 = vsub.f32 %v229, %v232
    %v234 = vmul.f32 %v233, 1.442695
    %v235 = vpow.pop %v234
    %v236 = vsel %vm154, %v235, 0.0
    %237 = vadd.xlane.f32.xlu0 %v236
    %v238 = vpop.xlane.xlu0 %237
    %v239 = vrcp.pop %v238
    %v240 = vmul.f32 %v235, %v239
    %241 = vrot.lane.b32.xlu0 %v143, 64
    %v242 = vpop.permute.xlu0 %241
    %v245 = vsel %vm154, %v240, 0
    %247 = vmatprep.subr.mxu0 0.0
    %248 = vmatpush1.msra.mxu0 %v242
    %249 = vmatprep.subr.mxu0 0.0
    %250 = vmatpush1.msra.mxu0 0.0
    %251 = vmatprep.subr.mxu0 0.0
    %252 = vmatpush1.msra.mxu0 0.0
    %253 = vmatprep.subr.mxu0 0.0
    %254 = vmatpush1.msra.mxu0 0.0
    %255 = vmatprep.subr.mxu0 0.0
    %256 = vmatpush1.msra.mxu0 0.0
    %257 = vmatprep.subr.mxu0 0.0
    %258 = vmatpush1.msra.mxu0 0.0
    %259 = vmatprep.subr.mxu0 0.0
    %260 = vmatpush1.msra.mxu0 0.0
    %261 = vmatprep.subr.mxu0 0.0
    %262 = vmatpush1.msra.mxu0 0.0
    %263 = vmatprep.subr.mxu0 0.0
    %264 = vmatpush1.msra.mxu0 0.0
    %265 = vmatprep.subr.mxu0 0.0
    %266 = vmatpush1.msra.mxu0 0.0
    %267 = vmatprep.subr.mxu0 0.0
    %268 = vmatpush1.msra.mxu0 0.0
    %269 = vmatprep.subr.mxu0 0.0
    %270 = vmatpush1.msra.mxu0 0.0
    %271 = vmatprep.subr.mxu0 0.0
    %272 = vmatpush1.msra.mxu0 0.0
    %273 = vmatprep.subr.mxu0 0.0
    %274 = vmatpush1.msra.mxu0 0.0
    %275 = vmatprep.subr.mxu0 0.0
    %276 = vmatpush1.msra.mxu0 0.0
    %277 = vmatprep.subr.mxu0 0.0
    %278 = vmatpush1.msra.mxu0 0.0
    %279 = vmatprep.subr.mxu0 0.0
    %280 = vmatpush1.msra.mxu0 0.0
    %281 = vmatprep.subr.mxu0 0.0
    %282 = vmatpush1.msra.mxu0 0.0
    %283 = vmatprep.subr.mxu0 0.0
    %284 = vmatpush1.msra.mxu0 0.0
    %285 = vmatprep.subr.mxu0 0.0
    %286 = vmatpush1.msra.mxu0 0.0
    %287 = vmatprep.subr.mxu0 0.0
    %288 = vmatpush1.msra.mxu0 0.0
    %289 = vmatprep.subr.mxu0 0.0
    %290 = vmatpush1.msra.mxu0 0.0
    %291 = vmatprep.subr.mxu0 0.0
    %292 = vmatpush1.msra.mxu0 0.0
    %293 = vmatprep.subr.mxu0 0.0
    %294 = vmatpush1.msra.mxu0 0.0
    %295 = vmatprep.subr.mxu0 0.0
    %296 = vmatpush1.msra.mxu0 0.0
    %297 = vmatprep.subr.mxu0 0.0
    %298 = vmatpush1.msra.mxu0 0.0
    %299 = vmatprep.subr.mxu0 0.0
    %300 = vmatpush1.msra.mxu0 0.0
    %301 = vmatprep.subr.mxu0 0.0
    %302 = vmatpush1.msra.mxu0 0.0
    %303 = vmatprep.subr.mxu0 0.0
    %304 = vmatpush1.msra.mxu0 0.0
    %305 = vmatprep.subr.mxu0 0.0
    %306 = vmatpush1.msra.mxu0 0.0
    %307 = vmatprep.subr.mxu0 0.0
    %308 = vmatpush1.msra.mxu0 0.0
    %309 = vmatprep.subr.mxu0 0.0
    %310 = vmatpush1.msra.mxu0 0.0
    %311 = vmatprep.mubr.f32.mxu0 0.0
    %312 = vmatmul.mubr.f32.gmra.mrb[0].mxu0 %v245
    %v313 = vpop.f32.mrb[0].mxu0
    %v314 = vadd.f32 0.0, %v313
    %v315 = vpop.f32.mrb[0].mxu0
    %316 = vdwg.mxu0
    %318 = vrot.lane.b32.xlu0 %v148, 96
    %v319 = vpop.permute.xlu0 %318
    %v320 = vsel %vm154, %v148, 0
    %v322 = vsel %vm154, %v319, 0
    %324 = vmatprep.subr.mxu0 0.0
    %325 = vmatpush1.xpose.msra.mxu0 %v322
    %326 = vmatprep.subr.mxu0 0.0
    %327 = vmatpush1.xpose.msra.mxu0 0.0
    %328 = vmatprep.subr.mxu0 0.0
    %329 = vmatpush1.xpose.msra.mxu0 0.0
    %330 = vmatprep.subr.mxu0 0.0
    %331 = vmatpush1.xpose.msra.mxu0 0.0
    %332 = vmatprep.subr.mxu0 0.0
    %333 = vmatpush1.xpose.msra.mxu0 0.0
    %334 = vmatprep.subr.mxu0 0.0
    %335 = vmatpush1.xpose.msra.mxu0 0.0
    %336 = vmatprep.subr.mxu0 0.0
    %337 = vmatpush1.xpose.msra.mxu0 0.0
    %338 = vmatprep.subr.mxu0 0.0
    %339 = vmatpush1.xpose.msra.mxu0 0.0
    %340 = vmatprep.subr.mxu0 0.0
    %341 = vmatpush1.xpose.msra.mxu0 0.0
    %342 = vmatprep.subr.mxu0 0.0
    %343 = vmatpush1.xpose.msra.mxu0 0.0
    %344 = vmatprep.subr.mxu0 0.0
    %345 = vmatpush1.xpose.msra.mxu0 0.0
    %346 = vmatprep.subr.mxu0 0.0
    %347 = vmatpush1.xpose.msra.mxu0 0.0
    %348 = vmatprep.subr.mxu0 0.0
    %349 = vmatpush1.xpose.msra.mxu0 0.0
    %350 = vmatprep.subr.mxu0 0.0
    %351 = vmatpush1.xpose.msra.mxu0 0.0
    %352 = vmatprep.subr.mxu0 0.0
    %353 = vmatpush1.xpose.msra.mxu0 0.0
    %354 = vmatprep.subr.mxu0 0.0
    %355 = vmatpush1.xpose.msra.mxu0 0.0
    %356 = vmatprep.subr.mxu0 0.0
    %357 = vmatpush1.xpose.msra.mxu0 0.0
    %358 = vmatprep.subr.mxu0 0.0
    %359 = vmatpush1.xpose.msra.mxu0 0.0
    %360 = vmatprep.subr.mxu0 0.0
    %361 = vmatpush1.xpose.msra.mxu0 0.0
    %362 = vmatprep.subr.mxu0 0.0
    %363 = vmatpush1.xpose.msra.mxu0 0.0
    %364 = vmatprep.subr.mxu0 0.0
    %365 = vmatpush1.xpose.msra.mxu0 0.0
    %366 = vmatprep.subr.mxu0 0.0
    %367 = vmatpush1.xpose.msra.mxu0 0.0
    %368 = vmatprep.subr.mxu0 0.0
    %369 = vmatpush1.xpose.msra.mxu0 0.0
    %370 = vmatprep.subr.mxu0 0.0
    %371 = vmatpush1.xpose.msra.mxu0 0.0
    %372 = vmatprep.subr.mxu0 0.0
    %373 = vmatpush1.xpose.msra.mxu0 0.0
    %374 = vmatprep.subr.mxu0 0.0
    %375 = vmatpush1.xpose.msra.mxu0 0.0
    %376 = vmatprep.subr.mxu0 0.0
    %377 = vmatpush1.xpose.msra.mxu0 0.0
    %378 = vmatprep.subr.mxu0 0.0
    %379 = vmatpush1.xpose.msra.mxu0 0.0
    %380 = vmatprep.subr.mxu0 0.0
    %381 = vmatpush1.xpose.msra.mxu0 0.0
    %382 = vmatprep.subr.mxu0 0.0
    %383 = vmatpush1.xpose.msra.mxu0 0.0
    %384 = vmatprep.subr.mxu0 0.0
    %385 = vmatpush1.xpose.msra.mxu0 0.0
    %386 = vmatprep.subr.mxu0 0.0
    %387 = vmatpush1.xpose.msra.mxu0 0.0
    %388 = vmatprep.mubr.f32.mxu0 0.0
    %389 = vmatmul.mubr.f32.gmra.mrb[0].mxu0 %v320
    %v390 = vpop.f32.mrb[0].mxu0
    %v391 = vadd.f32 0.0, %v390
    %v392 = vpop.f32.mrb[0].mxu0
    %393 = vdwg.mxu0
    %v394 = vmul.f32 %v391, 0.17677669
    %v395 = vsel %vm154, %v394, -inf
    %396 = vmax.xlane.f32.xlu0 %v395
    %v397 = vpop.xlane.xlu0 %396
    %v398 = vsub.f32 %v394, %v397
    %v399 = vmul.f32 %v398, 1.442695
    %v400 = vpow.pop %v399
    %v401 = vsel %vm154, %v400, 0.0
    %402 = vadd.xlane.f32.xlu0 %v401
    %v403 = vpop.xlane.xlu0 %402
    %v404 = vrcp.pop %v403
    %v405 = vmul.f32 %v400, %v404
    %406 = vrot.lane.b32.xlu0 %v148, 64
    %v407 = vpop.permute.xlu0 %406
    %v410 = vsel %vm154, %v405, 0
    %412 = vmatprep.subr.mxu0 0.0
    %413 = vmatpush1.msra.mxu0 %v407
    %414 = vmatprep.subr.mxu0 0.0
    %415 = vmatpush1.msra.mxu0 0.0
    %416 = vmatprep.subr.mxu0 0.0
    %417 = vmatpush1.msra.mxu0 0.0
    %418 = vmatprep.subr.mxu0 0.0
    %419 = vmatpush1.msra.mxu0 0.0
    %420 = vmatprep.subr.mxu0 0.0
    %421 = vmatpush1.msra.mxu0 0.0
    %422 = vmatprep.subr.mxu0 0.0
    %423 = vmatpush1.msra.mxu0 0.0
    %424 = vmatprep.subr.mxu0 0.0
    %425 = vmatpush1.msra.mxu0 0.0
    %426 = vmatprep.subr.mxu0 0.0
    %427 = vmatpush1.msra.mxu0 0.0
    %428 = vmatprep.subr.mxu0 0.0
    %429 = vmatpush1.msra.mxu0 0.0
    %430 = vmatprep.subr.mxu0 0.0
    %431 = vmatpush1.msra.mxu0 0.0
    %432 = vmatprep.subr.mxu0 0.0
    %433 = vmatpush1.msra.mxu0 0.0
    %434 = vmatprep.subr.mxu0 0.0
    %435 = vmatpush1.msra.mxu0 0.0
    %436 = vmatprep.subr.mxu0 0.0
    %437 = vmatpush1.msra.mxu0 0.0
    %438 = vmatprep.subr.mxu0 0.0
    %439 = vmatpush1.msra.mxu0 0.0
    %440 = vmatprep.subr.mxu0 0.0
    %441 = vmatpush1.msra.mxu0 0.0
    %442 = vmatprep.subr.mxu0 0.0
    %443 = vmatpush1.msra.mxu0 0.0
    %444 = vmatprep.subr.mxu0 0.0
    %445 = vmatpush1.msra.mxu0 0.0
    %446 = vmatprep.subr.mxu0 0.0
    %447 = vmatpush1.msra.mxu0 0.0
    %448 = vmatprep.subr.mxu0 0.0
    %449 = vmatpush1.msra.mxu0 0.0
    %450 = vmatprep.subr.mxu0 0.0
    %451 = vmatpush1.msra.mxu0 0.0
    %452 = vmatprep.subr.mxu0 0.0
    %453 = vmatpush1.msra.mxu0 0.0
    %454 = vmatprep.subr.mxu0 0.0
    %455 = vmatpush1.msra.mxu0 0.0
    %456 = vmatprep.subr.mxu0 0.0
    %457 = vmatpush1.msra.mxu0 0.0
    %458 = vmatprep.subr.mxu0 0.0
    %459 = vmatpush1.msra.mxu0 0.0
    %460 = vmatprep.subr.mxu0 0.0
    %461 = vmatpush1.msra.mxu0 0.0
    %462 = vmatprep.subr.mxu0 0.0
    %463 = vmatpush1.msra.mxu0 0.0
    %464 = vmatprep.subr.mxu0 0.0
    %465 = vmatpush1.msra.mxu0 0.0
    %466 = vmatprep.subr.mxu0 0.0
    %467 = vmatpush1.msra.mxu0 0.0
    %468 = vmatprep.subr.mxu0 0.0
    %469 = vmatpush1.msra.mxu0 0.0
    %470 = vmatprep.subr.mxu0 0.0
    %471 = vmatpush1.msra.mxu0 0.0
    %472 = vmatprep.subr.mxu0 0.0
    %473 = vmatpush1.msra.mxu0 0.0
    %474 = vmatprep.subr.mxu0 0.0
    %475 = vmatpush1.msra.mxu0 0.0
    %476 = vmatprep.mubr.f32.mxu0 0.0
    %477 = vmatmul.mubr.f32.gmra.mrb[0].mxu0 %v410
    %v478 = vpop.f32.mrb[0].mxu0
    %v479 = vadd.f32 0.0, %v478
    %v480 = vpop.f32.mrb[0].mxu0
    %481 = vdwg.mxu0
    %482 = vrot.lane.b32.xlu0 %v143, 120
    %v483 = vpop.permute.xlu0 %482
    %484 = vrot.lane.b32.xlu0 %v143, 88
    %v485 = vpop.permute.xlu0 %484
    %v486 = vsel %vm154, %v483, 0
    %v488 = vsel %vm154, %v485, 0
    %490 = vmatprep.subr.mxu0 0.0
    %491 = vmatpush1.xpose.msra.mxu0 %v488
    %492 = vmatprep.subr.mxu0 0.0
    %493 = vmatpush1.xpose.msra.mxu0 0.0
    %494 = vmatprep.subr.mxu0 0.0
    %495 = vmatpush1.xpose.msra.mxu0 0.0
    %496 = vmatprep.subr.mxu0 0.0
    %497 = vmatpush1.xpose.msra.mxu0 0.0
    %498 = vmatprep.subr.mxu0 0.0
    %499 = vmatpush1.xpose.msra.mxu0 0.0
    %500 = vmatprep.subr.mxu0 0.0
    %501 = vmatpush1.xpose.msra.mxu0 0.0
    %502 = vmatprep.subr.mxu0 0.0
    %503 = vmatpush1.xpose.msra.mxu0 0.0
    %504 = vmatprep.subr.mxu0 0.0
    %505 = vmatpush1.xpose.msra.mxu0 0.0
    %506 = vmatprep.subr.mxu0 0.0
    %507 = vmatpush1.xpose.msra.mxu0 0.0
    %508 = vmatprep.subr.mxu0 0.0
    %509 = vmatpush1.xpose.msra.mxu0 0.0
    %510 = vmatprep.subr.mxu0 0.0
    %511 = vmatpush1.xpose.msra.mxu0 0.0
    %512 = vmatprep.subr.mxu0 0.0
    %513 = vmatpush1.xpose.msra.mxu0 0.0
    %514 = vmatprep.subr.mxu0 0.0
    %515 = vmatpush1.xpose.msra.mxu0 0.0
    %516 = vmatprep.subr.mxu0 0.0
    %517 = vmatpush1.xpose.msra.mxu0 0.0
    %518 = vmatprep.subr.mxu0 0.0
    %519 = vmatpush1.xpose.msra.mxu0 0.0
    %520 = vmatprep.subr.mxu0 0.0
    %521 = vmatpush1.xpose.msra.mxu0 0.0
    %522 = vmatprep.subr.mxu0 0.0
    %523 = vmatpush1.xpose.msra.mxu0 0.0
    %524 = vmatprep.subr.mxu0 0.0
    %525 = vmatpush1.xpose.msra.mxu0 0.0
    %526 = vmatprep.subr.mxu0 0.0
    %527 = vmatpush1.xpose.msra.mxu0 0.0
    %528 = vmatprep.subr.mxu0 0.0
    %529 = vmatpush1.xpose.msra.mxu0 0.0
    %530 = vmatprep.subr.mxu0 0.0
    %531 = vmatpush1.xpose.msra.mxu0 0.0
    %532 = vmatprep.subr.mxu0 0.0
    %533 = vmatpush1.xpose.msra.mxu0 0.0
    %534 = vmatprep.subr.mxu0 0.0
    %535 = vmatpush1.xpose.msra.mxu0 0.0
    %536 = vmatprep.subr.mxu0 0.0
    %537 = vmatpush1.xpose.msra.mxu0 0.0
    %538 = vmatprep.subr.mxu0 0.0
    %539 = vmatpush1.xpose.msra.mxu0 0.0
    %540 = vmatprep.subr.mxu0 0.0
    %541 = vmatpush1.xpose.msra.mxu0 0.0
    %542 = vmatprep.subr.mxu0 0.0
    %543 = vmatpush1.xpose.msra.mxu0 0.0
    %544 = vmatprep.subr.mxu0 0.0
    %545 = vmatpush1.xpose.msra.mxu0 0.0
    %546 = vmatprep.subr.mxu0 0.0
    %547 = vmatpush1.xpose.msra.mxu0 0.0
    %548 = vmatprep.subr.mxu0 0.0
    %549 = vmatpush1.xpose.msra.mxu0 0.0
    %550 = vmatprep.subr.mxu0 0.0
    %551 = vmatpush1.xpose.msra.mxu0 0.0
    %552 = vmatprep.subr.mxu0 0.0
    %553 = vmatpush1.xpose.msra.mxu0 0.0
    %554 = vmatprep.mubr.f32.mxu0 0.0
    %555 = vmatmul.mubr.f32.gmra.mrb[0].mxu0 %v486
    %v556 = vpop.f32.mrb[0].mxu0
    %v557 = vadd.f32 0.0, %v556
    %v558 = vpop.f32.mrb[0].mxu0
    %559 = vdwg.mxu0
    %v560 = vmul.f32 %v557, 0.17677669
    %v561 = vsel %vm154, %v560, -inf
    %562 = vmax.xlane.f32.xlu0 %v561
    %v563 = vpop.xlane.xlu0 %562
    %v564 = vsub.f32 %v560, %v563
    %v565 = vmul.f32 %v564, 1.442695
    %v566 = vpow.pop %v565
    %v567 = vsel %vm154, %v566, 0.0
    %568 = vadd.xlane.f32.xlu0 %v567
    %v569 = vpop.xlane.xlu0 %568
    %v570 = vrcp.pop %v569
    %v571 = vmul.f32 %v566, %v570
    %572 = vrot.lane.b32.xlu0 %v143, 56
    %v573 = vpop.permute.xlu0 %572
    %v576 = vsel %vm154, %v571, 0
    %578 = vmatprep.subr.mxu0 0.0
    %579 = vmatpush1.msra.mxu0 %v573
    %580 = vmatprep.subr.mxu0 0.0
    %581 = vmatpush1.msra.mxu0 0.0
    %582 = vmatprep.subr.mxu0 0.0
    %583 = vmatpush1.msra.mxu0 0.0
    %584 = vmatprep.subr.mxu0 0.0
    %585 = vmatpush1.msra.mxu0 0.0
    %586 = vmatprep.subr.mxu0 0.0
    %587 = vmatpush1.msra.mxu0 0.0
    %588 = vmatprep.subr.mxu0 0.0
    %589 = vmatpush1.msra.mxu0 0.0
    %590 = vmatprep.subr.mxu0 0.0
    %591 = vmatpush1.msra.mxu0 0.0
    %592 = vmatprep.subr.mxu0 0.0
    %593 = vmatpush1.msra.mxu0 0.0
    %594 = vmatprep.subr.mxu0 0.0
    %595 = vmatpush1.msra.mxu0 0.0
    %596 = vmatprep.subr.mxu0 0.0
    %597 = vmatpush1.msra.mxu0 0.0
    %598 = vmatprep.subr.mxu0 0.0
    %599 = vmatpush1.msra.mxu0 0.0
    %600 = vmatprep.subr.mxu0 0.0
    %601 = vmatpush1.msra.mxu0 0.0
    %602 = vmatprep.subr.mxu0 0.0
    %603 = vmatpush1.msra.mxu0 0.0
    %604 = vmatprep.subr.mxu0 0.0
    %605 = vmatpush1.msra.mxu0 0.0
    %606 = vmatprep.subr.mxu0 0.0
    %607 = vmatpush1.msra.mxu0 0.0
    %608 = vmatprep.subr.mxu0 0.0
    %609 = vmatpush1.msra.mxu0 0.0
    %610 = vmatprep.subr.mxu0 0.0
    %611 = vmatpush1.msra.mxu0 0.0
    %612 = vmatprep.subr.mxu0 0.0
    %613 = vmatpush1.msra.mxu0 0.0
    %614 = vmatprep.subr.mxu0 0.0
    %615 = vmatpush1.msra.mxu0 0.0
    %616 = vmatprep.subr.mxu0 0.0
    %617 = vmatpush1.msra.mxu0 0.0
    %618 = vmatprep.subr.mxu0 0.0
    %619 = vmatpush1.msra.mxu0 0.0
    %620 = vmatprep.subr.mxu0 0.0
    %621 = vmatpush1.msra.mxu0 0.0
    %622 = vmatprep.subr.mxu0 0.0
    %623 = vmatpush1.msra.mxu0 0.0
    %624 = vmatprep.subr.mxu0 0.0
    %625 = vmatpush1.msra.mxu0 0.0
    %626 = vmatprep.subr.mxu0 0.0
    %627 = vmatpush1.msra.mxu0 0.0
    %628 = vmatprep.subr.mxu0 0.0
    %629 = vmatpush1.msra.mxu0 0.0
    %630 = vmatprep.subr.mxu0 0.0
    %631 = vmatpush1.msra.mxu0 0.0
    %632 = vmatprep.subr.mxu0 0.0
    %633 = vmatpush1.msra.mxu0 0.0
    %634 = vmatprep.subr.mxu0 0.0
    %635 = vmatpush1.msra.mxu0 0.0
    %636 = vmatprep.subr.mxu0 0.0
    %637 = vmatpush1.msra.mxu0 0.0
    %638 = vmatprep.subr.mxu0 0.0
    %639 = vmatpush1.msra.mxu0 0.0
    %640 = vmatprep.subr.mxu0 0.0
    %641 = vmatpush1.msra.mxu0 0.0
    %642 = vmatprep.mubr.f32.mxu0 0.0
    %643 = vmatmul.mubr.f32.gmra.mrb[0].mxu0 %v576
    %v644 = vpop.f32.mrb[0].mxu0
    %v645 = vadd.f32 0.0, %v644
    %v646 = vpop.f32.mrb[0].mxu0
    %647 = vdwg.mxu0
    %648 = vrot.lane.b32.xlu0 %v148, 120
    %v649 = vpop.permute.xlu0 %648
    %650 = vrot.lane.b32.xlu0 %v148, 88
    %v651 = vpop.permute.xlu0 %650
    %v652 = vsel %vm154, %v649, 0
    %v654 = vsel %vm154, %v651, 0
    %656 = vmatprep.subr.mxu0 0.0
    %657 = vmatpush1.xpose.msra.mxu0 %v654
    %658 = vmatprep.subr.mxu0 0.0
    %659 = vmatpush1.xpose.msra.mxu0 0.0
    %660 = vmatprep.subr.mxu0 0.0
    %661 = vmatpush1.xpose.msra.mxu0 0.0
    %662 = vmatprep.subr.mxu0 0.0
    %663 = vmatpush1.xpose.msra.mxu0 0.0
    %664 = vmatprep.subr.mxu0 0.0
    %665 = vmatpush1.xpose.msra.mxu0 0.0
    %666 = vmatprep.subr.mxu0 0.0
    %667 = vmatpush1.xpose.msra.mxu0 0.0
    %668 = vmatprep.subr.mxu0 0.0
    %669 = vmatpush1.xpose.msra.mxu0 0.0
    %670 = vmatprep.subr.mxu0 0.0
    %671 = vmatpush1.xpose.msra.mxu0 0.0
    %672 = vmatprep.subr.mxu0 0.0
    %673 = vmatpush1.xpose.msra.mxu0 0.0
    %674 = vmatprep.subr.mxu0 0.0
    %675 = vmatpush1.xpose.msra.mxu0 0.0
    %676 = vmatprep.subr.mxu0 0.0
    %677 = vmatpush1.xpose.msra.mxu0 0.0
    %678 = vmatprep.subr.mxu0 0.0
    %679 = vmatpush1.xpose.msra.mxu0 0.0
    %680 = vmatprep.subr.mxu0 0.0
    %681 = vmatpush1.xpose.msra.mxu0 0.0
    %682 = vmatprep.subr.mxu0 0.0
    %683 = vmatpush1.xpose.msra.mxu0 0.0
    %684 = vmatprep.subr.mxu0 0.0
    %685 = vmatpush1.xpose.msra.mxu0 0.0
    %686 = vmatprep.subr.mxu0 0.0
    %687 = vmatpush1.xpose.msra.mxu0 0.0
    %688 = vmatprep.subr.mxu0 0.0
    %689 = vmatpush1.xpose.msra.mxu0 0.0
    %690 = vmatprep.subr.mxu0 0.0
    %691 = vmatpush1.xpose.msra.mxu0 0.0
    %692 = vmatprep.subr.mxu0 0.0
    %693 = vmatpush1.xpose.msra.mxu0 0.0
    %694 = vmatprep.subr.mxu0 0.0
    %695 = vmatpush1.xpose.msra.mxu0 0.0
    %696 = vmatprep.subr.mxu0 0.0
    %697 = vmatpush1.xpose.msra.mxu0 0.0
    %698 = vmatprep.subr.mxu0 0.0
    %699 = vmatpush1.xpose.msra.mxu0 0.0
    %700 = vmatprep.subr.mxu0 0.0
    %701 = vmatpush1.xpose.msra.mxu0 0.0
    %702 = vmatprep.subr.mxu0 0.0
    %703 = vmatpush1.xpose.msra.mxu0 0.0
    %704 = vmatprep.subr.mxu0 0.0
    %705 = vmatpush1.xpose.msra.mxu0 0.0
    %706 = vmatprep.subr.mxu0 0.0
    %707 = vmatpush1.xpose.msra.mxu0 0.0
    %708 = vmatprep.subr.mxu0 0.0
    %709 = vmatpush1.xpose.msra.mxu0 0.0
    %710 = vmatprep.subr.mxu0 0.0
    %711 = vmatpush1.xpose.msra.mxu0 0.0
    %712 = vmatprep.subr.mxu0 0.0
    %713 = vmatpush1.xpose.msra.mxu0 0.0
    %714 = vmatprep.subr.mxu0 0.0
    %715 = vmatpush1.xpose.msra.mxu0 0.0
    %716 = vmatprep.subr.mxu0 0.0
    %717 = vmatpush1.xpose.msra.mxu0 0.0
    %718 = vmatprep.subr.mxu0 0.0
    %719 = vmatpush1.xpose.msra.mxu0 0.0
    %720 = vmatprep.mubr.f32.mxu0 0.0
    %721 = vmatmul.mubr.f32.gmra.mrb[0].mxu0 %v652
    %v722 = vpop.f32.mrb[0].mxu0
    %v723 = vadd.f32 0.0, %v722
    %v724 = vpop.f32.mrb[0].mxu0
    %725 = vdwg.mxu0
    %v726 = vmul.f32 %v723, 0.17677669
    %v727 = vsel %vm154, %v726, -inf
    %728 = vmax.xlane.f32.xlu0 %v727
    %v729 = vpop.xlane.xlu0 %728
    %v730 = vsub.f32 %v726, %v729
    %v731 = vmul.f32 %v730, 1.442695
    %v732 = vpow.pop %v731
    %v733 = vsel %vm154, %v732, 0.0
    %734 = vadd.xlane.f32.xlu0 %v733
    %v735 = vpop.xlane.xlu0 %734
    %v736 = vrcp.pop %v735
    %v737 = vmul.f32 %v732, %v736
    %738 = vrot.lane.b32.xlu0 %v148, 56
    %v739 = vpop.permute.xlu0 %738
    %v742 = vsel %vm154, %v737, 0
    %744 = vmatprep.subr.mxu0 0.0
    %745 = vmatpush1.msra.mxu0 %v739
    %746 = vmatprep.subr.mxu0 0.0
    %747 = vmatpush1.msra.mxu0 0.0
    %748 = vmatprep.subr.mxu0 0.0
    %749 = vmatpush1.msra.mxu0 0.0
    %750 = vmatprep.subr.mxu0 0.0
    %751 = vmatpush1.msra.mxu0 0.0
    %752 = vmatprep.subr.mxu0 0.0
    %753 = vmatpush1.msra.mxu0 0.0
    %754 = vmatprep.subr.mxu0 0.0
    %755 = vmatpush1.msra.mxu0 0.0
    %756 = vmatprep.subr.mxu0 0.0
    %757 = vmatpush1.msra.mxu0 0.0
    %758 = vmatprep.subr.mxu0 0.0
    %759 = vmatpush1.msra.mxu0 0.0
    %760 = vmatprep.subr.mxu0 0.0
    %761 = vmatpush1.msra.mxu0 0.0
    %762 = vmatprep.subr.mxu0 0.0
    %763 = vmatpush1.msra.mxu0 0.0
    %764 = vmatprep.subr.mxu0 0.0
    %765 = vmatpush1.msra.mxu0 0.0
    %766 = vmatprep.subr.mxu0 0.0
    %767 = vmatpush1.msra.mxu0 0.0
    %768 = vmatprep.subr.mxu0 0.0
    %769 = vmatpush1.msra.mxu0 0.0
    %770 = vmatprep.subr.mxu0 0.0
    %771 = vmatpush1.msra.mxu0 0.0
    %772 = vmatprep.subr.mxu0 0.0
    %773 = vmatpush1.msra.mxu0 0.0
    %774 = vmatprep.subr.mxu0 0.0
    %775 = vmatpush1.msra.mxu0 0.0
    %776 = vmatprep.subr.mxu0 0.0
    %777 = vmatpush1.msra.mxu0 0.0
    %778 = vmatprep.subr.mxu0 0.0
    %779 = vmatpush1.msra.mxu0 0.0
    %780 = vmatprep.subr.mxu0 0.0
    %781 = vmatpush1.msra.mxu0 0.0
    %782 = vmatprep.subr.mxu0 0.0
    %783 = vmatpush1.msra.mxu0 0.0
    %784 = vmatprep.subr.mxu0 0.0
    %785 = vmatpush1.msra.mxu0 0.0
    %786 = vmatprep.subr.mxu0 0.0
    %787 = vmatpush1.msra.mxu0 0.0
    %788 = vmatprep.subr.mxu0 0.0
    %789 = vmatpush1.msra.mxu0 0.0
    %790 = vmatprep.subr.mxu0 0.0
    %791 = vmatpush1.msra.mxu0 0.0
    %792 = vmatprep.subr.mxu0 0.0
    %793 = vmatpush1.msra.mxu0 0.0
    %794 = vmatprep.subr.mxu0 0.0
    %795 = vmatpush1.msra.mxu0 0.0
    %796 = vmatprep.subr.mxu0 0.0
    %797 = vmatpush1.msra.mxu0 0.0
    %798 = vmatprep.subr.mxu0 0.0
    %799 = vmatpush1.msra.mxu0 0.0
    %800 = vmatprep.subr.mxu0 0.0
    %801 = vmatpush1.msra.mxu0 0.0
    %802 = vmatprep.subr.mxu0 0.0
    %803 = vmatpush1.msra.mxu0 0.0
    %804 = vmatprep.subr.mxu0 0.0
    %805 = vmatpush1.msra.mxu0 0.0
    %806 = vmatprep.subr.mxu0 0.0
    %807 = vmatpush1.msra.mxu0 0.0
    %808 = vmatprep.mubr.f32.mxu0 0.0
    %809 = vmatmul.mubr.f32.gmra.mrb[0].mxu0 %v742
    %v810 = vpop.f32.mrb[0].mxu0
    %v811 = vadd.f32 0.0, %v810
    %v812 = vpop.f32.mrb[0].mxu0
    %813 = vdwg.mxu0
    %814 = vrot.lane.b32.xlu0 %v143, 112
    %v815 = vpop.permute.xlu0 %814
    %816 = vrot.lane.b32.xlu0 %v143, 80
    %v817 = vpop.permute.xlu0 %816
    %v818 = vsel %vm154, %v815, 0
    %v820 = vsel %vm154, %v817, 0
    %822 = vmatprep.subr.mxu0 0.0
    %823 = vmatpush1.xpose.msra.mxu0 %v820
    %824 = vmatprep.subr.mxu0 0.0
    %825 = vmatpush1.xpose.msra.mxu0 0.0
    %826 = vmatprep.subr.mxu0 0.0
    %827 = vmatpush1.xpose.msra.mxu0 0.0
    %828 = vmatprep.subr.mxu0 0.0
    %829 = vmatpush1.xpose.msra.mxu0 0.0
    %830 = vmatprep.subr.mxu0 0.0
    %831 = vmatpush1.xpose.msra.mxu0 0.0
    %832 = vmatprep.subr.mxu0 0.0
    %833 = vmatpush1.xpose.msra.mxu0 0.0
    %834 = vmatprep.subr.mxu0 0.0
    %835 = vmatpush1.xpose.msra.mxu0 0.0
    %836 = vmatprep.subr.mxu0 0.0
    %837 = vmatpush1.xpose.msra.mxu0 0.0
    %838 = vmatprep.subr.mxu0 0.0
    %839 = vmatpush1.xpose.msra.mxu0 0.0
    %840 = vmatprep.subr.mxu0 0.0
    %841 = vmatpush1.xpose.msra.mxu0 0.0
    %842 = vmatprep.subr.mxu0 0.0
    %843 = vmatpush1.xpose.msra.mxu0 0.0
    %844 = vmatprep.subr.mxu0 0.0
    %845 = vmatpush1.xpose.msra.mxu0 0.0
    %846 = vmatprep.subr.mxu0 0.0
    %847 = vmatpush1.xpose.msra.mxu0 0.0
    %848 = vmatprep.subr.mxu0 0.0
    %849 = vmatpush1.xpose.msra.mxu0 0.0
    %850 = vmatprep.subr.mxu0 0.0
    %851 = vmatpush1.xpose.msra.mxu0 0.0
    %852 = vmatprep.subr.mxu0 0.0
    %853 = vmatpush1.xpose.msra.mxu0 0.0
    %854 = vmatprep.subr.mxu0 0.0
    %855 = vmatpush1.xpose.msra.mxu0 0.0
    %856 = vmatprep.subr.mxu0 0.0
    %857 = vmatpush1.xpose.msra.mxu0 0.0
    %858 = vmatprep.subr.mxu0 0.0
    %859 = vmatpush1.xpose.msra.mxu0 0.0
    %860 = vmatprep.subr.mxu0 0.0
    %861 = vmatpush1.xpose.msra.mxu0 0.0
    %862 = vmatprep.subr.mxu0 0.0
    %863 = vmatpush1.xpose.msra.mxu0 0.0
    %864 = vmatprep.subr.mxu0 0.0
    %865 = vmatpush1.xpose.msra.mxu0 0.0
    %866 = vmatprep.subr.mxu0 0.0
    %867 = vmatpush1.xpose.msra.mxu0 0.0
    %868 = vmatprep.subr.mxu0 0.0
    %869 = vmatpush1.xpose.msra.mxu0 0.0
    %870 = vmatprep.subr.mxu0 0.0
    %871 = vmatpush1.xpose.msra.mxu0 0.0
    %872 = vmatprep.subr.mxu0 0.0
    %873 = vmatpush1.xpose.msra.mxu0 0.0
    %874 = vmatprep.subr.mxu0 0.0
    %875 = vmatpush1.xpose.msra.mxu0 0.0
    %876 = vmatprep.subr.mxu0 0.0
    %877 = vmatpush1.xpose.msra.mxu0 0.0
    %878 = vmatprep.subr.mxu0 0.0
    %879 = vmatpush1.xpose.msra.mxu0 0.0
    %880 = vmatprep.subr.mxu0 0.0
    %881 = vmatpush1.xpose.msra.mxu0 0.0
    %882 = vmatprep.subr.mxu0 0.0
    %883 = vmatpush1.xpose.msra.mxu0 0.0
    %884 = vmatprep.subr.mxu0 0.0
    %885 = vmatpush1.xpose.msra.mxu0 0.0
    %886 = vmatprep.mubr.f32.mxu0 0.0
    %887 = vmatmul.mubr.f32.gmra.mrb[0].mxu0 %v818
    %v888 = vpop.f32.mrb[0].mxu0
    %v889 = vadd.f32 0.0, %v888
    %v890 = vpop.f32.mrb[0].mxu0
    %891 = vdwg.mxu0
    %v892 = vmul.f32 %v889, 0.17677669
    %v893 = vsel %vm154, %v892, -inf
    %894 = vmax.xlane.f32.xlu0 %v893
    %v895 = vpop.xlane.xlu0 %894
    %v896 = vsub.f32 %v892, %v895
    %v897 = vmul.f32 %v896, 1.442695
    %v898 = vpow.pop %v897
    %v899 = vsel %vm154, %v898, 0.0
    %900 = vadd.xlane.f32.xlu0 %v899
    %v901 = vpop.xlane.xlu0 %900
    %v902 = vrcp.pop %v901
    %v903 = vmul.f32 %v898, %v902
    %904 = vrot.lane.b32.xlu0 %v143, 48
    %v905 = vpop.permute.xlu0 %904
    %v908 = vsel %vm154, %v903, 0
    %910 = vmatprep.subr.mxu0 0.0
    %911 = vmatpush1.msra.mxu0 %v905
    %912 = vmatprep.subr.mxu0 0.0
    %913 = vmatpush1.msra.mxu0 0.0
    %914 = vmatprep.subr.mxu0 0.0
    %915 = vmatpush1.msra.mxu0 0.0
    %916 = vmatprep.subr.mxu0 0.0
    %917 = vmatpush1.msra.mxu0 0.0
    %918 = vmatprep.subr.mxu0 0.0
    %919 = vmatpush1.msra.mxu0 0.0
    %920 = vmatprep.subr.mxu0 0.0
    %921 = vmatpush1.msra.mxu0 0.0
    %922 = vmatprep.subr.mxu0 0.0
    %923 = vmatpush1.msra.mxu0 0.0
    %924 = vmatprep.subr.mxu0 0.0
    %925 = vmatpush1.msra.mxu0 0.0
    %926 = vmatprep.subr.mxu0 0.0
    %927 = vmatpush1.msra.mxu0 0.0
    %928 = vmatprep.subr.mxu0 0.0
    %929 = vmatpush1.msra.mxu0 0.0
    %930 = vmatprep.subr.mxu0 0.0
    %931 = vmatpush1.msra.mxu0 0.0
    %932 = vmatprep.subr.mxu0 0.0
    %933 = vmatpush1.msra.mxu0 0.0
    %934 = vmatprep.subr.mxu0 0.0
    %935 = vmatpush1.msra.mxu0 0.0
    %936 = vmatprep.subr.mxu0 0.0
    %937 = vmatpush1.msra.mxu0 0.0
    %938 = vmatprep.subr.mxu0 0.0
    %939 = vmatpush1.msra.mxu0 0.0
    %940 = vmatprep.subr.mxu0 0.0
    %941 = vmatpush1.msra.mxu0 0.0
    %942 = vmatprep.subr.mxu0 0.0
    %943 = vmatpush1.msra.mxu0 0.0
    %944 = vmatprep.subr.mxu0 0.0
    %945 = vmatpush1.msra.mxu0 0.0
    %946 = vmatprep.subr.mxu0 0.0
    %947 = vmatpush1.msra.mxu0 0.0
    %948 = vmatprep.subr.mxu0 0.0
    %949 = vmatpush1.msra.mxu0 0.0
    %950 = vmatprep.subr.mxu0 0.0
    %951 = vmatpush1.msra.mxu0 0.0
    %952 = vmatprep.subr.mxu0 0.0
    %953 = vmatpush1.msra.mxu0 0.0
    %954 = vmatprep.subr.mxu0 0.0
    %955 = vmatpush1.msra.mxu0 0.0
    %956 = vmatprep.subr.mxu0 0.0
    %957 = vmatpush1.msra.mxu0 0.0
    %958 = vmatprep.subr.mxu0 0.0
    %959 = vmatpush1.msra.mxu0 0.0
    %960 = vmatprep.subr.mxu0 0.0
    %961 = vmatpush1.msra.mxu0 0.0
    %962 = vmatprep.subr.mxu0 0.0
    %963 = vmatpush1.msra.mxu0 0.0
    %964 = vmatprep.subr.mxu0 0.0
    %965 = vmatpush1.msra.mxu0 0.0
    %966 = vmatprep.subr.mxu0 0.0
    %967 = vmatpush1.msra.mxu0 0.0
    %968 = vmatprep.subr.mxu0 0.0
    %969 = vmatpush1.msra.mxu0 0.0
    %970 = vmatprep.subr.mxu0 0.0
    %971 = vmatpush1.msra.mxu0 0.0
    %972 = vmatprep.subr.mxu0 0.0
    %973 = vmatpush1.msra.mxu0 0.0
    %974 = vmatprep.mubr.f32.mxu0 0.0
    %975 = vmatmul.mubr.f32.gmra.mrb[0].mxu0 %v908
    %v976 = vpop.f32.mrb[0].mxu0
    %v977 = vadd.f32 0.0, %v976
    %v978 = vpop.f32.mrb[0].mxu0
    %979 = vdwg.mxu0
    %980 = vrot.lane.b32.xlu0 %v148, 112
    %v981 = vpop.permute.xlu0 %980
    %982 = vrot.lane.b32.xlu0 %v148, 80
    %v983 = vpop.permute.xlu0 %982
    %v984 = vsel %vm154, %v981, 0
    %v986 = vsel %vm154, %v983, 0
    %988 = vmatprep.subr.mxu0 0.0
    %989 = vmatpush1.xpose.msra.mxu0 %v986
    %990 = vmatprep.subr.mxu0 0.0
    %991 = vmatpush1.xpose.msra.mxu0 0.0
    %992 = vmatprep.subr.mxu0 0.0
    %993 = vmatpush1.xpose.msra.mxu0 0.0
    %994 = vmatprep.subr.mxu0 0.0
    %995 = vmatpush1.xpose.msra.mxu0 0.0
    %996 = vmatprep.subr.mxu0 0.0
    %997 = vmatpush1.xpose.msra.mxu0 0.0
    %998 = vmatprep.subr.mxu0 0.0
    %999 = vmatpush1.xpose.msra.mxu0 0.0
    %1000 = vmatprep.subr.mxu0 0.0
    %1001 = vmatpush1.xpose.msra.mxu0 0.0
    %1002 = vmatprep.subr.mxu0 0.0
    %1003 = vmatpush1.xpose.msra.mxu0 0.0
    %1004 = vmatprep.subr.mxu0 0.0
    %1005 = vmatpush1.xpose.msra.mxu0 0.0
    %1006 = vmatprep.subr.mxu0 0.0
    %1007 = vmatpush1.xpose.msra.mxu0 0.0
    %1008 = vmatprep.subr.mxu0 0.0
    %1009 = vmatpush1.xpose.msra.mxu0 0.0
    %1010 = vmatprep.subr.mxu0 0.0
    %1011 = vmatpush1.xpose.msra.mxu0 0.0
    %1012 = vmatprep.subr.mxu0 0.0
    %1013 = vmatpush1.xpose.msra.mxu0 0.0
    %1014 = vmatprep.subr.mxu0 0.0
    %1015 = vmatpush1.xpose.msra.mxu0 0.0
    %1016 = vmatprep.subr.mxu0 0.0
    %1017 = vmatpush1.xpose.msra.mxu0 0.0
    %1018 = vmatprep.subr.mxu0 0.0
    %1019 = vmatpush1.xpose.msra.mxu0 0.0
    %1020 = vmatprep.subr.mxu0 0.0
    %1021 = vmatpush1.xpose.msra.mxu0 0.0
    %1022 = vmatprep.subr.mxu0 0.0
    %1023 = vmatpush1.xpose.msra.mxu0 0.0
    %1024 = vmatprep.subr.mxu0 0.0
    %1025 = vmatpush1.xpose.msra.mxu0 0.0
    %1026 = vmatprep.subr.mxu0 0.0
    %1027 = vmatpush1.xpose.msra.mxu0 0.0
    %1028 = vmatprep.subr.mxu0 0.0
    %1029 = vmatpush1.xpose.msra.mxu0 0.0
    %1030 = vmatprep.subr.mxu0 0.0
    %1031 = vmatpush1.xpose.msra.mxu0 0.0
    %1032 = vmatprep.subr.mxu0 0.0
    %1033 = vmatpush1.xpose.msra.mxu0 0.0
    %1034 = vmatprep.subr.mxu0 0.0
    %1035 = vmatpush1.xpose.msra.mxu0 0.0
    %1036 = vmatprep.subr.mxu0 0.0
    %1037 = vmatpush1.xpose.msra.mxu0 0.0
    %1038 = vmatprep.subr.mxu0 0.0
    %1039 = vmatpush1.xpose.msra.mxu0 0.0
    %1040 = vmatprep.subr.mxu0 0.0
    %1041 = vmatpush1.xpose.msra.mxu0 0.0
    %1042 = vmatprep.subr.mxu0 0.0
    %1043 = vmatpush1.xpose.msra.mxu0 0.0
    %1044 = vmatprep.subr.mxu0 0.0
    %1045 = vmatpush1.xpose.msra.mxu0 0.0
    %1046 = vmatprep.subr.mxu0 0.0
    %1047 = vmatpush1.xpose.msra.mxu0 0.0
    %1048 = vmatprep.subr.mxu0 0.0
    %1049 = vmatpush1.xpose.msra.mxu0 0.0
    %1050 = vmatprep.subr.mxu0 0.0
    %1051 = vmatpush1.xpose.msra.mxu0 0.0
    %1052 = vmatprep.mubr.f32.mxu0 0.0
    %1053 = vmatmul.mubr.f32.gmra.mrb[0].mxu0 %v984
    %v1054 = vpop.f32.mrb[0].mxu0
    %v1055 = vadd.f32 0.0, %v1054
    %v1056 = vpop.f32.mrb[0].mxu0
    %1057 = vdwg.mxu0
    %v1058 = vmul.f32 %v1055, 0.17677669
    %v1059 = vsel %vm154, %v1058, -inf
    %1060 = vmax.xlane.f32.xlu0 %v1059
    %v1061 = vpop.xlane.xlu0 %1060
    %v1062 = vsub.f32 %v1058, %v1061
    %v1063 = vmul.f32 %v1062, 1.442695
    %v1064 = vpow.pop %v1063
    %v1065 = vsel %vm154, %v1064, 0.0
    %1066 = vadd.xlane.f32.xlu0 %v1065
    %v1067 = vpop.xlane.xlu0 %1066
    %v1068 = vrcp.pop %v1067
    %v1069 = vmul.f32 %v1064, %v1068
    %1070 = vrot.lane.b32.xlu0 %v148, 48
    %v1071 = vpop.permute.xlu0 %1070
    %v1074 = vsel %vm154, %v1069, 0
    %1076 = vmatprep.subr.mxu0 0.0
    %1077 = vmatpush1.msra.mxu0 %v1071
    %1078 = vmatprep.subr.mxu0 0.0
    %1079 = vmatpush1.msra.mxu0 0.0
    %1080 = vmatprep.subr.mxu0 0.0
    %1081 = vmatpush1.msra.mxu0 0.0
    %1082 = vmatprep.subr.mxu0 0.0
    %1083 = vmatpush1.msra.mxu0 0.0
    %1084 = vmatprep.subr.mxu0 0.0
    %1085 = vmatpush1.msra.mxu0 0.0
    %1086 = vmatprep.subr.mxu0 0.0
    %1087 = vmatpush1.msra.mxu0 0.0
    %1088 = vmatprep.subr.mxu0 0.0
    %1089 = vmatpush1.msra.mxu0 0.0
    %1090 = vmatprep.subr.mxu0 0.0
    %1091 = vmatpush1.msra.mxu0 0.0
    %1092 = vmatprep.subr.mxu0 0.0
    %1093 = vmatpush1.msra.mxu0 0.0
    %1094 = vmatprep.subr.mxu0 0.0
    %1095 = vmatpush1.msra.mxu0 0.0
    %1096 = vmatprep.subr.mxu0 0.0
    %1097 = vmatpush1.msra.mxu0 0.0
    %1098 = vmatprep.subr.mxu0 0.0
    %1099 = vmatpush1.msra.mxu0 0.0
    %1100 = vmatprep.subr.mxu0 0.0
    %1101 = vmatpush1.msra.mxu0 0.0
    %1102 = vmatprep.subr.mxu0 0.0
    %1103 = vmatpush1.msra.mxu0 0.0
    %1104 = vmatprep.subr.mxu0 0.0
    %1105 = vmatpush1.msra.mxu0 0.0
    %1106 = vmatprep.subr.mxu0 0.0
    %1107 = vmatpush1.msra.mxu0 0.0
    %1108 = vmatprep.subr.mxu0 0.0
    %1109 = vmatpush1.msra.mxu0 0.0
    %1110 = vmatprep.subr.mxu0 0.0
    %1111 = vmatpush1.msra.mxu0 0.0
    %1112 = vmatprep.subr.mxu0 0.0
    %1113 = vmatpush1.msra.mxu0 0.0
    %1114 = vmatprep.subr.mxu0 0.0
    %1115 = vmatpush1.msra.mxu0 0.0
    %1116 = vmatprep.subr.mxu0 0.0
    %1117 = vmatpush1.msra.mxu0 0.0
    %1118 = vmatprep.subr.mxu0 0.0
    %1119 = vmatpush1.msra.mxu0 0.0
    %1120 = vmatprep.subr.mxu0 0.0
    %1121 = vmatpush1.msra.mxu0 0.0
    %1122 = vmatprep.subr.mxu0 0.0
    %1123 = vmatpush1.msra.mxu0 0.0
    %1124 = vmatprep.subr.mxu0 0.0
    %1125 = vmatpush1.msra.mxu0 0.0
    %1126 = vmatprep.subr.mxu0 0.0
    %1127 = vmatpush1.msra.mxu0 0.0
    %1128 = vmatprep.subr.mxu0 0.0
    %1129 = vmatpush1.msra.mxu0 0.0
    %1130 = vmatprep.subr.mxu0 0.0
    %1131 = vmatpush1.msra.mxu0 0.0
    %1132 = vmatprep.subr.mxu0 0.0
    %1133 = vmatpush1.msra.mxu0 0.0
    %1134 = vmatprep.subr.mxu0 0.0
    %1135 = vmatpush1.msra.mxu0 0.0
    %1136 = vmatprep.subr.mxu0 0.0
    %1137 = vmatpush1.msra.mxu0 0.0
    %1138 = vmatprep.subr.mxu0 0.0
    %1139 = vmatpush1.msra.mxu0 0.0
    %1140 = vmatprep.mubr.f32.mxu0 0.0
    %1141 = vmatmul.mubr.f32.gmra.mrb[0].mxu0 %v1074
    %v1142 = vpop.f32.mrb[0].mxu0
    %v1143 = vadd.f32 0.0, %v1142
    %v1144 = vpop.f32.mrb[0].mxu0
    %1145 = vdwg.mxu0
    %1146 = vrot.lane.b32.xlu0 %v143, 104
    %v1147 = vpop.permute.xlu0 %1146
    %1148 = vrot.lane.b32.xlu0 %v143, 72
    %v1149 = vpop.permute.xlu0 %1148
    %v1150 = vsel %vm154, %v1147, 0
    %v1152 = vsel %vm154, %v1149, 0
    %1154 = vmatprep.subr.mxu0 0.0
    %1155 = vmatpush1.xpose.msra.mxu0 %v1152
    %1156 = vmatprep.subr.mxu0 0.0
    %1157 = vmatpush1.xpose.msra.mxu0 0.0
    %1158 = vmatprep.subr.mxu0 0.0
    %1159 = vmatpush1.xpose.msra.mxu0 0.0
    %1160 = vmatprep.subr.mxu0 0.0
    %1161 = vmatpush1.xpose.msra.mxu0 0.0
    %1162 = vmatprep.subr.mxu0 0.0
    %1163 = vmatpush1.xpose.msra.mxu0 0.0
    %1164 = vmatprep.subr.mxu0 0.0
    %1165 = vmatpush1.xpose.msra.mxu0 0.0
    %1166 = vmatprep.subr.mxu0 0.0
    %1167 = vmatpush1.xpose.msra.mxu0 0.0
    %1168 = vmatprep.subr.mxu0 0.0
    %1169 = vmatpush1.xpose.msra.mxu0 0.0
    %1170 = vmatprep.subr.mxu0 0.0
    %1171 = vmatpush1.xpose.msra.mxu0 0.0
    %1172 = vmatprep.subr.mxu0 0.0
    %1173 = vmatpush1.xpose.msra.mxu0 0.0
    %1174 = vmatprep.subr.mxu0 0.0
    %1175 = vmatpush1.xpose.msra.mxu0 0.0
    %1176 = vmatprep.subr.mxu0 0.0
    %1177 = vmatpush1.xpose.msra.mxu0 0.0
    %1178 = vmatprep.subr.mxu0 0.0
    %1179 = vmatpush1.xpose.msra.mxu0 0.0
    %1180 = vmatprep.subr.mxu0 0.0
    %1181 = vmatpush1.xpose.msra.mxu0 0.0
    %1182 = vmatprep.subr.mxu0 0.0
    %1183 = vmatpush1.xpose.msra.mxu0 0.0
    %1184 = vmatprep.subr.mxu0 0.0
    %1185 = vmatpush1.xpose.msra.mxu0 0.0
    %1186 = vmatprep.subr.mxu0 0.0
    %1187 = vmatpush1.xpose.msra.mxu0 0.0
    %1188 = vmatprep.subr.mxu0 0.0
    %1189 = vmatpush1.xpose.msra.mxu0 0.0
    %1190 = vmatprep.subr.mxu0 0.0
    %1191 = vmatpush1.xpose.msra.mxu0 0.0
    %1192 = vmatprep.subr.mxu0 0.0
    %1193 = vmatpush1.xpose.msra.mxu0 0.0
    %1194 = vmatprep.subr.mxu0 0.0
    %1195 = vmatpush1.xpose.msra.mxu0 0.0
    %1196 = vmatprep.subr.mxu0 0.0
    %1197 = vmatpush1.xpose.msra.mxu0 0.0
    %1198 = vmatprep.subr.mxu0 0.0
    %1199 = vmatpush1.xpose.msra.mxu0 0.0
    %1200 = vmatprep.subr.mxu0 0.0
    %1201 = vmatpush1.xpose.msra.mxu0 0.0
    %1202 = vmatprep.subr.mxu0 0.0
    %1203 = vmatpush1.xpose.msra.mxu0 0.0
    %1204 = vmatprep.subr.mxu0 0.0
    %1205 = vmatpush1.xpose.msra.mxu0 0.0
    %1206 = vmatprep.subr.mxu0 0.0
    %1207 = vmatpush1.xpose.msra.mxu0 0.0
    %1208 = vmatprep.subr.mxu0 0.0
    %1209 = vmatpush1.xpose.msra.mxu0 0.0
    %1210 = vmatprep.subr.mxu0 0.0
    %1211 = vmatpush1.xpose.msra.mxu0 0.0
    %1212 = vmatprep.subr.mxu0 0.0
    %1213 = vmatpush1.xpose.msra.mxu0 0.0
    %1214 = vmatprep.subr.mxu0 0.0
    %1215 = vmatpush1.xpose.msra.mxu0 0.0
    %1216 = vmatprep.subr.mxu0 0.0
    %1217 = vmatpush1.xpose.msra.mxu0 0.0
    %1218 = vmatprep.mubr.f32.mxu0 0.0
    %1219 = vmatmul.mubr.f32.gmra.mrb[0].mxu0 %v1150
    %v1220 = vpop.f32.mrb[0].mxu0
    %v1221 = vadd.f32 0.0, %v1220
    %v1222 = vpop.f32.mrb[0].mxu0
    %1223 = vdwg.mxu0
    %v1224 = vmul.f32 %v1221, 0.17677669
    %v1225 = vsel %vm154, %v1224, -inf
    %1226 = vmax.xlane.f32.xlu0 %v1225
    %v1227 = vpop.xlane.xlu0 %1226
    %v1228 = vsub.f32 %v1224, %v1227
    %v1229 = vmul.f32 %v1228, 1.442695
    %v1230 = vpow.pop %v1229
    %v1231 = vsel %vm154, %v1230, 0.0
    %1232 = vadd.xlane.f32.xlu0 %v1231
    %v1233 = vpop.xlane.xlu0 %1232
    %v1234 = vrcp.pop %v1233
    %v1235 = vmul.f32 %v1230, %v1234
    %1236 = vrot.lane.b32.xlu0 %v143, 40
    %v1237 = vpop.permute.xlu0 %1236
    %v1240 = vsel %vm154, %v1235, 0
    %1242 = vmatprep.subr.mxu0 0.0
    %1243 = vmatpush1.msra.mxu0 %v1237
    %1244 = vmatprep.subr.mxu0 0.0
    %1245 = vmatpush1.msra.mxu0 0.0
    %1246 = vmatprep.subr.mxu0 0.0
    %1247 = vmatpush1.msra.mxu0 0.0
    %1248 = vmatprep.subr.mxu0 0.0
    %1249 = vmatpush1.msra.mxu0 0.0
    %1250 = vmatprep.subr.mxu0 0.0
    %1251 = vmatpush1.msra.mxu0 0.0
    %1252 = vmatprep.subr.mxu0 0.0
    %1253 = vmatpush1.msra.mxu0 0.0
    %1254 = vmatprep.subr.mxu0 0.0
    %1255 = vmatpush1.msra.mxu0 0.0
    %1256 = vmatprep.subr.mxu0 0.0
    %1257 = vmatpush1.msra.mxu0 0.0
    %1258 = vmatprep.subr.mxu0 0.0
    %1259 = vmatpush1.msra.mxu0 0.0
    %1260 = vmatprep.subr.mxu0 0.0
    %1261 = vmatpush1.msra.mxu0 0.0
    %1262 = vmatprep.subr.mxu0 0.0
    %1263 = vmatpush1.msra.mxu0 0.0
    %1264 = vmatprep.subr.mxu0 0.0
    %1265 = vmatpush1.msra.mxu0 0.0
    %1266 = vmatprep.subr.mxu0 0.0
    %1267 = vmatpush1.msra.mxu0 0.0
    %1268 = vmatprep.subr.mxu0 0.0
    %1269 = vmatpush1.msra.mxu0 0.0
    %1270 = vmatprep.subr.mxu0 0.0
    %1271 = vmatpush1.msra.mxu0 0.0
    %1272 = vmatprep.subr.mxu0 0.0
    %1273 = vmatpush1.msra.mxu0 0.0
    %1274 = vmatprep.subr.mxu0 0.0
    %1275 = vmatpush1.msra.mxu0 0.0
    %1276 = vmatprep.subr.mxu0 0.0
    %1277 = vmatpush1.msra.mxu0 0.0
    %1278 = vmatprep.subr.mxu0 0.0
    %1279 = vmatpush1.msra.mxu0 0.0
    %1280 = vmatprep.subr.mxu0 0.0
    %1281 = vmatpush1.msra.mxu0 0.0
    %1282 = vmatprep.subr.mxu0 0.0
    %1283 = vmatpush1.msra.mxu0 0.0
    %1284 = vmatprep.subr.mxu0 0.0
    %1285 = vmatpush1.msra.mxu0 0.0
    %1286 = vmatprep.subr.mxu0 0.0
    %1287 = vmatpush1.msra.mxu0 0.0
    %1288 = vmatprep.subr.mxu0 0.0
    %1289 = vmatpush1.msra.mxu0 0.0
    %1290 = vmatprep.subr.mxu0 0.0
    %1291 = vmatpush1.msra.mxu0 0.0
    %1292 = vmatprep.subr.mxu0 0.0
    %1293 = vmatpush1.msra.mxu0 0.0
    %1294 = vmatprep.subr.mxu0 0.0
    %1295 = vmatpush1.msra.mxu0 0.0
    %1296 = vmatprep.subr.mxu0 0.0
    %1297 = vmatpush1.msra.mxu0 0.0
    %1298 = vmatprep.subr.mxu0 0.0
    %1299 = vmatpush1.msra.mxu0 0.0
    %1300 = vmatprep.subr.mxu0 0.0
    %1301 = vmatpush1.msra.mxu0 0.0
    %1302 = vmatprep.subr.mxu0 0.0
    %1303 = vmatpush1.msra.mxu0 0.0
    %1304 = vmatprep.subr.mxu0 0.0
    %1305 = vmatpush1.msra.mxu0 0.0
    %1306 = vmatprep.mubr.f32.mxu0 0.0
    %1307 = vmatmul.mubr.f32.gmra.mrb[0].mxu0 %v1240
    %v1308 = vpop.f32.mrb[0].mxu0
    %v1309 = vadd.f32 0.0, %v1308
    %v1310 = vpop.f32.mrb[0].mxu0
    %1311 = vdwg.mxu0
    %1312 = vrot.lane.b32.xlu0 %v148, 104
    %v1313 = vpop.permute.xlu0 %1312
    %1314 = vrot.lane.b32.xlu0 %v148, 72
    %v1315 = vpop.permute.xlu0 %1314
    %v1316 = vsel %vm154, %v1313, 0
    %v1318 = vsel %vm154, %v1315, 0
    %1320 = vmatprep.subr.mxu0 0.0
    %1321 = vmatpush1.xpose.msra.mxu0 %v1318
    %1322 = vmatprep.subr.mxu0 0.0
    %1323 = vmatpush1.xpose.msra.mxu0 0.0
    %1324 = vmatprep.subr.mxu0 0.0
    %1325 = vmatpush1.xpose.msra.mxu0 0.0
    %1326 = vmatprep.subr.mxu0 0.0
    %1327 = vmatpush1.xpose.msra.mxu0 0.0
    %1328 = vmatprep.subr.mxu0 0.0
    %1329 = vmatpush1.xpose.msra.mxu0 0.0
    %1330 = vmatprep.subr.mxu0 0.0
    %1331 = vmatpush1.xpose.msra.mxu0 0.0
    %1332 = vmatprep.subr.mxu0 0.0
    %1333 = vmatpush1.xpose.msra.mxu0 0.0
    %1334 = vmatprep.subr.mxu0 0.0
    %1335 = vmatpush1.xpose.msra.mxu0 0.0
    %1336 = vmatprep.subr.mxu0 0.0
    %1337 = vmatpush1.xpose.msra.mxu0 0.0
    %1338 = vmatprep.subr.mxu0 0.0
    %1339 = vmatpush1.xpose.msra.mxu0 0.0
    %1340 = vmatprep.subr.mxu0 0.0
    %1341 = vmatpush1.xpose.msra.mxu0 0.0
    %1342 = vmatprep.subr.mxu0 0.0
    %1343 = vmatpush1.xpose.msra.mxu0 0.0
    %1344 = vmatprep.subr.mxu0 0.0
    %1345 = vmatpush1.xpose.msra.mxu0 0.0
    %1346 = vmatprep.subr.mxu0 0.0
    %1347 = vmatpush1.xpose.msra.mxu0 0.0
    %1348 = vmatprep.subr.mxu0 0.0
    %1349 = vmatpush1.xpose.msra.mxu0 0.0
    %1350 = vmatprep.subr.mxu0 0.0
    %1351 = vmatpush1.xpose.msra.mxu0 0.0
    %1352 = vmatprep.subr.mxu0 0.0
    %1353 = vmatpush1.xpose.msra.mxu0 0.0
    %1354 = vmatprep.subr.mxu0 0.0
    %1355 = vmatpush1.xpose.msra.mxu0 0.0
    %1356 = vmatprep.subr.mxu0 0.0
    %1357 = vmatpush1.xpose.msra.mxu0 0.0
    %1358 = vmatprep.subr.mxu0 0.0
    %1359 = vmatpush1.xpose.msra.mxu0 0.0
    %1360 = vmatprep.subr.mxu0 0.0
    %1361 = vmatpush1.xpose.msra.mxu0 0.0
    %1362 = vmatprep.subr.mxu0 0.0
    %1363 = vmatpush1.xpose.msra.mxu0 0.0
    %1364 = vmatprep.subr.mxu0 0.0
    %1365 = vmatpush1.xpose.msra.mxu0 0.0
    %1366 = vmatprep.subr.mxu0 0.0
    %1367 = vmatpush1.xpose.msra.mxu0 0.0
    %1368 = vmatprep.subr.mxu0 0.0
    %1369 = vmatpush1.xpose.msra.mxu0 0.0
    %1370 = vmatprep.subr.mxu0 0.0
    %1371 = vmatpush1.xpose.msra.mxu0 0.0
    %1372 = vmatprep.subr.mxu0 0.0
    %1373 = vmatpush1.xpose.msra.mxu0 0.0
    %1374 = vmatprep.subr.mxu0 0.0
    %1375 = vmatpush1.xpose.msra.mxu0 0.0
    %1376 = vmatprep.subr.mxu0 0.0
    %1377 = vmatpush1.xpose.msra.mxu0 0.0
    %1378 = vmatprep.subr.mxu0 0.0
    %1379 = vmatpush1.xpose.msra.mxu0 0.0
    %1380 = vmatprep.subr.mxu0 0.0
    %1381 = vmatpush1.xpose.msra.mxu0 0.0
    %1382 = vmatprep.subr.mxu0 0.0
    %1383 = vmatpush1.xpose.msra.mxu0 0.0
    %1384 = vmatprep.mubr.f32.mxu0 0.0
    %1385 = vmatmul.mubr.f32.gmra.mrb[0].mxu0 %v1316
    %v1386 = vpop.f32.mrb[0].mxu0
    %v1387 = vadd.f32 0.0, %v1386
    %v1388 = vpop.f32.mrb[0].mxu0
    %1389 = vdwg.mxu0
    %v1390 = vmul.f32 %v1387, 0.17677669
    %v1391 = vsel %vm154, %v1390, -inf
    %1392 = vmax.xlane.f32.xlu0 %v1391
    %v1393 = vpop.xlane.xlu0 %1392
    %v1394 = vsub.f32 %v1390, %v1393
    %v1395 = vmul.f32 %v1394, 1.442695
    %v1396 = vpow.pop %v1395
    %v1397 = vsel %vm154, %v1396, 0.0
    %1398 = vadd.xlane.f32.xlu0 %v1397
    %v1399 = vpop.xlane.xlu0 %1398
    %v1400 = vrcp.pop %v1399
    %v1401 = vmul.f32 %v1396, %v1400
    %1402 = vrot.lane.b32.xlu0 %v148, 40
    %v1403 = vpop.permute.xlu0 %1402
    %v1406 = vsel %vm154, %v1401, 0
    %1408 = vmatprep.subr.mxu0 0.0
    %1409 = vmatpush1.msra.mxu0 %v1403
    %1410 = vmatprep.subr.mxu0 0.0
    %1411 = vmatpush1.msra.mxu0 0.0
    %1412 = vmatprep.subr.mxu0 0.0
    %1413 = vmatpush1.msra.mxu0 0.0
    %1414 = vmatprep.subr.mxu0 0.0
    %1415 = vmatpush1.msra.mxu0 0.0
    %1416 = vmatprep.subr.mxu0 0.0
    %1417 = vmatpush1.msra.mxu0 0.0
    %1418 = vmatprep.subr.mxu0 0.0
    %1419 = vmatpush1.msra.mxu0 0.0
    %1420 = vmatprep.subr.mxu0 0.0
    %1421 = vmatpush1.msra.mxu0 0.0
    %1422 = vmatprep.subr.mxu0 0.0
    %1423 = vmatpush1.msra.mxu0 0.0
    %1424 = vmatprep.subr.mxu0 0.0
    %1425 = vmatpush1.msra.mxu0 0.0
    %1426 = vmatprep.subr.mxu0 0.0
    %1427 = vmatpush1.msra.mxu0 0.0
    %1428 = vmatprep.subr.mxu0 0.0
    %1429 = vmatpush1.msra.mxu0 0.0
    %1430 = vmatprep.subr.mxu0 0.0
    %1431 = vmatpush1.msra.mxu0 0.0
    %1432 = vmatprep.subr.mxu0 0.0
    %1433 = vmatpush1.msra.mxu0 0.0
    %1434 = vmatprep.subr.mxu0 0.0
    %1435 = vmatpush1.msra.mxu0 0.0
    %1436 = vmatprep.subr.mxu0 0.0
    %1437 = vmatpush1.msra.mxu0 0.0
    %1438 = vmatprep.subr.mxu0 0.0
    %1439 = vmatpush1.msra.mxu0 0.0
    %1440 = vmatprep.subr.mxu0 0.0
    %1441 = vmatpush1.msra.mxu0 0.0
    %1442 = vmatprep.subr.mxu0 0.0
    %1443 = vmatpush1.msra.mxu0 0.0
    %1444 = vmatprep.subr.mxu0 0.0
    %1445 = vmatpush1.msra.mxu0 0.0
    %1446 = vmatprep.subr.mxu0 0.0
    %1447 = vmatpush1.msra.mxu0 0.0
    %1448 = vmatprep.subr.mxu0 0.0
    %1449 = vmatpush1.msra.mxu0 0.0
    %1450 = vmatprep.subr.mxu0 0.0
    %1451 = vmatpush1.msra.mxu0 0.0
    %1452 = vmatprep.subr.mxu0 0.0
    %1453 = vmatpush1.msra.mxu0 0.0
    %1454 = vmatprep.subr.mxu0 0.0
    %1455 = vmatpush1.msra.mxu0 0.0
    %1456 = vmatprep.subr.mxu0 0.0
    %1457 = vmatpush1.msra.mxu0 0.0
    %1458 = vmatprep.subr.mxu0 0.0
    %1459 = vmatpush1.msra.mxu0 0.0
    %1460 = vmatprep.subr.mxu0 0.0
    %1461 = vmatpush1.msra.mxu0 0.0
    %1462 = vmatprep.subr.mxu0 0.0
    %1463 = vmatpush1.msra.mxu0 0.0
    %1464 = vmatprep.subr.mxu0 0.0
    %1465 = vmatpush1.msra.mxu0 0.0
    %1466 = vmatprep.subr.mxu0 0.0
    %1467 = vmatpush1.msra.mxu0 0.0
    %1468 = vmatprep.subr.mxu0 0.0
    %1469 = vmatpush1.msra.mxu0 0.0
    %1470 = vmatprep.subr.mxu0 0.0
    %1471 = vmatpush1.msra.mxu0 0.0
    %1472 = vmatprep.mubr.f32.mxu0 0.0
    %1473 = vmatmul.mubr.f32.gmra.mrb[0].mxu0 %v1406
    %v1474 = vpop.f32.mrb[0].mxu0
    %v1475 = vadd.f32 0.0, %v1474
    %v1476 = vpop.f32.mrb[0].mxu0
    %1477 = vdwg.mxu0
    %1480 = vrot.lane.b32.xlu0 %v645, 8
    %v1481 = vpop.permute.xlu0 %1480
    %1482 = vrot.lane.b32.xlu0 %v811, 8
    %v1483 = vpop.permute.xlu0 %1482
    %1488 = vrot.lane.b32.xlu0 %v977, 16
    %v1489 = vpop.permute.xlu0 %1488
    %1490 = vrot.lane.b32.xlu0 %v1143, 16
    %v1491 = vpop.permute.xlu0 %1490
    %1496 = vrot.lane.b32.xlu0 %v1309, 24
    %v1497 = vpop.permute.xlu0 %1496
    %1498 = vrot.lane.b32.xlu0 %v1475, 24
    %v1499 = vpop.permute.xlu0 %1498
    %v1502 = vsel %vm154, %v314, %v1481
    %v1503 = vsel %vm154, %v479, %v1483
    %vm1504 = vcmask 130048
    %v1505 = vsel %vm1504, %v1502, %v1489
    %v1506 = vsel %vm1504, %v1503, %v1491
    %vm1507 = vcmask 195584
    %v1508 = vsel %vm1507, %v1505, %v1497
    %v1509 = vsel %vm1507, %v1506, %v1499
    %v1510 = vld [vmem:[%s3] sm:$0x1]
    %v1512 = vlaneseq
    %v1513 = vshrl.u32 %v1512, 7
    %v1514 = vsub.s32 0, %v1513
    %v1515 = vrot.slane %v1510, %v1514
    %v1518 = vsel %vm69, %v1508, 0
    %v1521 = vsel %vm69, %v1509, 0
    %1523 = vmatprep.subr.mxu0 0.0
    %1524 = vmatpush1.msra.mxu0 %v65
    %1525 = vmatprep.subr.mxu0 0.0
    %1526 = vmatpush1.msra.mxu0 %v66
    %1527 = vmatprep.subr.mxu0 0.0
    %1528 = vmatpush1.msra.mxu0 %v67
    %1529 = vmatprep.subr.mxu0 0.0
    %1530 = vmatpush1.msra.mxu0 %v68
    %1531 = vmatprep.subr.mxu0 0.0
    %1532 = vmatpush1.msra.mxu0 0.0
    %1533 = vmatprep.subr.mxu0 0.0
    %1534 = vmatpush1.msra.mxu0 0.0
    %1535 = vmatprep.subr.mxu0 0.0
    %1536 = vmatpush1.msra.mxu0 0.0
    %1537 = vmatprep.subr.mxu0 0.0
    %1538 = vmatpush1.msra.mxu0 0.0
    %1539 = vmatprep.subr.mxu0 0.0
    %1540 = vmatpush1.msra.mxu0 0.0
    %1541 = vmatprep.subr.mxu0 0.0
    %1542 = vmatpush1.msra.mxu0 0.0
    %1543 = vmatprep.subr.mxu0 0.0
    %1544 = vmatpush1.msra.mxu0 0.0
    %1545 = vmatprep.subr.mxu0 0.0
    %1546 = vmatpush1.msra.mxu0 0.0
    %1547 = vmatprep.subr.mxu0 0.0
    %1548 = vmatpush1.msra.mxu0 0.0
    %1549 = vmatprep.subr.mxu0 0.0
    %1550 = vmatpush1.msra.mxu0 0.0
    %1551 = vmatprep.subr.mxu0 0.0
    %1552 = vmatpush1.msra.mxu0 0.0
    %1553 = vmatprep.subr.mxu0 0.0
    %1554 = vmatpush1.msra.mxu0 0.0
    %1555 = vmatprep.subr.mxu0 0.0
    %1556 = vmatpush1.msra.mxu0 0.0
    %1557 = vmatprep.subr.mxu0 0.0
    %1558 = vmatpush1.msra.mxu0 0.0
    %1559 = vmatprep.subr.mxu0 0.0
    %1560 = vmatpush1.msra.mxu0 0.0
    %1561 = vmatprep.subr.mxu0 0.0
    %1562 = vmatpush1.msra.mxu0 0.0
    %1563 = vmatprep.subr.mxu0 0.0
    %1564 = vmatpush1.msra.mxu0 0.0
    %1565 = vmatprep.subr.mxu0 0.0
    %1566 = vmatpush1.msra.mxu0 0.0
    %1567 = vmatprep.subr.mxu0 0.0
    %1568 = vmatpush1.msra.mxu0 0.0
    %1569 = vmatprep.subr.mxu0 0.0
    %1570 = vmatpush1.msra.mxu0 0.0
    %1571 = vmatprep.subr.mxu0 0.0
    %1572 = vmatpush1.msra.mxu0 0.0
    %1573 = vmatprep.subr.mxu0 0.0
    %1574 = vmatpush1.msra.mxu0 0.0
    %1575 = vmatprep.subr.mxu0 0.0
    %1576 = vmatpush1.msra.mxu0 0.0
    %1577 = vmatprep.subr.mxu0 0.0
    %1578 = vmatpush1.msra.mxu0 0.0
    %1579 = vmatprep.subr.mxu0 0.0
    %1580 = vmatpush1.msra.mxu0 0.0
    %1581 = vmatprep.subr.mxu0 0.0
    %1582 = vmatpush1.msra.mxu0 0.0
    %1583 = vmatprep.subr.mxu0 0.0
    %1584 = vmatpush1.msra.mxu0 0.0
    %1585 = vmatprep.subr.mxu0 0.0
    %1586 = vmatpush1.msra.mxu0 0.0
    %1587 = vmatprep.mubr.f32.mxu0 0.0
    %1588 = vmatmul.mubr.f32.gmra.mrb[0].mxu0 %v1518
    %v1589 = vpop.f32.mrb[0].mxu0
    %v1590 = vadd.f32 %v1515, %v1589
    %v1591 = vpop.f32.mrb[0].mxu0
    %1592 = vmatprep.mubr.f32.mxu0 0.0
    %1593 = vmatmul.mubr.f32.gmra.mrb[0].mxu0 %v1521
    %v1594 = vpop.f32.mrb[0].mxu0
    %v1595 = vadd.f32 %v1515, %v1594
    %v1596 = vpop.f32.mrb[0].mxu0
    %1597 = vdwg.mxu0
    %1598 = vst.msk [vmem:[#allocation8] sm:$0xff] %vm69, %v1590
    %1599 = vst.msk [vmem:[#allocation8 + $0x8] sm:$0xff] %vm69, %v1595
    // Predicated region
    $region30: #{multi_head_attention.1} parent=1 // pred_check
      _
    $region31: #{multi_head_attention.1} parent=1 // pred_check_branch
      %1601 = sbr.rel (0) target = $region33
    $region32: #{multi_head_attention.1} parent=1 // pred_region
      %s1603 = ssub.s32 256, 256
      %1604 = vsyncadd [#allocation4], %s1603
      %s1605 = sshll.u32 [#allocation8], 4
      %s1606 = int_to_ptr.vmem [resolvable:$true] %s1605
      %1611 = dma.vmem_to_hbm [thread:$0]  %s1606, 256, %s4, [#allocation4], 128, 128, 8
    $region33: #{multi_head_attention.1} parent=1 // pred_fallthru
      _
    // Predicated region
    $region34: #{multi_head_attention.1} parent=1 // pred_check
      _
    $region35: #{multi_head_attention.1} parent=1 // pred_check_branch
      %1613 = sbr.rel (0) target = $region37
    $region36: #{multi_head_attention.1} parent=1 // pred_region
      %1614 = dma.done [#allocation4], 256
    $region37: #{multi_head_attention.1} parent=1 // pred_fallthru
      _
    %1615 = vsyncpa [#allocation3], 1
    %1616 = vsyncpa [#allocation6], 1
    %1617 = vsyncpa [#allocation4], 1

</llo_original>
